<compile_context>
chip_gen: v7x
topology: tpu7x:2x2x1
jax: 0.10.0
libtpu: 0.0.40
codegen_flags: <defaults>
</compile_context>

<pallas_src>
import math
import jax
import jax.numpy as jnp
from jax.experimental import pallas as pl
from jax.experimental.pallas import tpu as pltpu


def _round_up(x, m):
    return ((x + m - 1) // m) * m


def _ceil_div(a, b):
    return -(-a // b)


# ----------------------------------------------------------------------------
# Kernel: one batch tile (TB rows) through the whole MLP.
# Weights are (in, out) so each layer is y = x @ W + b (PyTorch W transposed).
# ----------------------------------------------------------------------------
def mlp_kernel(x_ref,
               w1_ref, b1_ref,
               w2_ref, b2_ref,
               w3_ref, b3_ref,
               w6_ref, b6_ref,
               w7_ref, b7_ref,
               w8_ref, b8_ref,
               o_ref):

    def linear_relu_bf16(h, w_ref, b_ref):
        # bf16 x bf16 on the MXU, f32 accumulation; bias/ReLU in f32, then
        # down-cast for the next layer's MXU feed.
        y = jnp.dot(h, w_ref[...], preferred_element_type=jnp.float32) + b_ref[...]
        return jnp.maximum(y, 0.0).astype(jnp.bfloat16)

    # Layer 1 (num_feat -> 128), K is tiny (3): keep it OFF the MXU.
    # Compute as num_feat broadcast multiply-adds on the VPU, in f32.
    x = x_ref[...]                      # (TB, num_feat) f32
    w1 = w1_ref[...]                    # (num_feat, 128) f32
    num_feat = x_ref.shape[1]
    y = x[:, 0:1] * w1[0:1, :] + b1_ref[...]
    for f in range(1, num_feat):        # static unroll (num_feat is tiny)
        y = y + x[:, f:f + 1] * w1[f:f + 1, :]
    h = jnp.maximum(y, 0.0).astype(jnp.bfloat16)          # (TB, 128)

    h = linear_relu_bf16(h, w2_ref, b2_ref)   # (TB, 256)
    h = linear_relu_bf16(h, w3_ref, b3_ref)   # (TB, 512)
    h = linear_relu_bf16(h, w6_ref, b6_ref)   # (TB, 256)
    h = linear_relu_bf16(h, w7_ref, b7_ref)   # (TB, 128)

    # Final 128 -> 1 layer: VPU multiply + lane reduction (XLU) instead of an
    # N=1 MXU push that would waste 255/256 of an MXU column. w8 is passed
    # pre-transposed as a (1, 128) f32 row.
    y = jnp.sum(h.astype(jnp.float32) * w8_ref[...], axis=-1, keepdims=True)
    o_ref[...] = y + b8_ref[...]


# ----------------------------------------------------------------------------
# Wrapper: batch tiling, param dtype/layout prep, pallas_call.
# ----------------------------------------------------------------------------
def _prepare_params(params):
    """Flatten params into kernel-arg order with kernel-side dtypes/layouts."""
    (w1, b1), (w2, b2), (w3, b3), (w6, b6), (w7, b7), (w8, b8) = params
    return [
        w1.astype(jnp.float32),  b1.astype(jnp.float32),   # fc1 on VPU, f32
        w2.astype(jnp.bfloat16), b2.astype(jnp.float32),
        w3.astype(jnp.bfloat16), b3.astype(jnp.float32),
        w6.astype(jnp.bfloat16), b6.astype(jnp.float32),
        w7.astype(jnp.bfloat16), b7.astype(jnp.float32),
        w8.T.astype(jnp.float32), b8.astype(jnp.float32),  # (1,128) row for VPU reduce
    ]


def _choose_batch_tile(B, tb_max):
    """Adaptive batch tile: balance padding; prefer an even step count (v7x megacore)."""
    n_steps = _ceil_div(B, tb_max)
    if n_steps > 1 and (n_steps % 2 == 1):
        n_steps += 1                       # even split across 2 TensorCores on v7x
    tb = _round_up(_ceil_div(B, n_steps), 16)   # multiple of 16 for bf16 sublanes
    return tb, tb * n_steps, n_steps


def conv_block_model_forward(x, params, *, tb_max=2048):
    """x: (B, num_feat) float32. params: list of (W, b) with W shape (in, out)."""
    B, num_feat = x.shape
    flat = _prepare_params(params)

    tb, Bp, n_steps = _choose_batch_tile(B, tb_max)
    if Bp != B:
        x = jnp.pad(x, ((0, Bp - B), (0, 0)))

    # x / out move with the grid; weights & biases are grid-invariant (resident).
    x_spec = pl.BlockSpec((tb, num_feat), lambda i: (i, 0))
    o_spec = pl.BlockSpec((tb, 1), lambda i: (i, 0))
    param_specs = [pl.BlockSpec(a.shape, lambda i: (0, 0)) for a in flat]

    flops = 2 * Bp * (num_feat * 128 + 128 * 256 + 256 * 512
                      + 512 * 256 + 256 * 128 + 128 * 1)
    param_bytes = sum(int(a.size) * a.dtype.itemsize for a in flat)
    bytes_accessed = Bp * (num_feat + 1) * 4 + param_bytes

    out = pl.pallas_call(
        mlp_kernel,
        out_shape=jax.ShapeDtypeStruct((Bp, 1), jnp.float32),
        grid=(n_steps,),
        in_specs=[x_spec] + param_specs,
        out_specs=o_spec,
        compiler_params=pltpu.CompilerParams(
            dimension_semantics=("parallel",),       # v7x: shard batch over both TCs
            vmem_limit_bytes=32 * 1024 * 1024,       # safe on 64 MiB v7x VMEM
        ),
        cost_estimate=pl.CostEstimate(
            flops=flops, transcendentals=0, bytes_accessed=bytes_accessed),
    )(x, *flat)

    return out[:B]


# ----------------------------------------------------------------------------
# Deterministic parameter init matching PyTorch:
#   kaiming_normal_(weight) * 0.1  (std = sqrt(2 / fan_in)), bias = 0.
# ----------------------------------------------------------------------------
def init_params(key, num_feat=3):
    dims = [(num_feat, 128), (128, 256), (256, 512), (512, 256), (256, 128), (128, 1)]
    params = []
    for (fan_in, fan_out) in dims:
        key, wkey = jax.random.split(key)
        std = math.sqrt(2.0 / fan_in) * 0.1
        w = jax.random.normal(wkey, (fan_in, fan_out), dtype=jnp.float32) * std
        b = jnp.zeros((1, fan_out), dtype=jnp.float32)
        params.append((w, b))
    return params


def reference_forward_f32(x, params):
    h = x
    for i, (w, b) in enumerate(params):
        h = h @ w + b
        if i < len(params) - 1:
            h = jnp.maximum(h, 0.0)
    return h


def reference_forward_kernel_precision(x, params):
    """Same dtype discipline / op structure as the kernel."""
    w1, b1 = params[0]
    y = x[:, 0:1] * w1[0:1, :] + b1
    for f in range(1, x.shape[1]):
        y = y + x[:, f:f + 1] * w1[f:f + 1, :]
    h = jnp.maximum(y, 0.0).astype(jnp.bfloat16)
    for (w, b) in params[1:-1]:
        y = jnp.dot(h, w.astype(jnp.bfloat16),
                    preferred_element_type=jnp.float32) + b
        h = jnp.maximum(y, 0.0).astype(jnp.bfloat16)
    w8, b8 = params[-1]
    return jnp.sum(h.astype(jnp.float32) * w8.T, axis=-1, keepdims=True) + b8


if __name__ == "__main__":
    key = jax.random.PRNGKey(0)
    pkey, xkey, xkey2 = jax.random.split(key, 3)

    num_feat = 3
    params = init_params(pkey, num_feat=num_feat)

    # --- small batch (single grid step) -------------------------------------
    batch = 8
    x = jax.random.normal(xkey, (batch, num_feat), dtype=jnp.float32)
    out = jax.block_until_ready(conv_block_model_forward(x, params))
    assert out.shape == (batch, 1), out.shape

    ref_bf16 = reference_forward_kernel_precision(x, params)
    ref_f32 = reference_forward_f32(x, params)
    assert jnp.allclose(out, ref_bf16, atol=1e-7, rtol=5e-2), (out, ref_bf16)
    assert jnp.allclose(out, ref_f32, atol=1e-5, rtol=5e-2), (out, ref_f32)

    # --- multi-step grid + adaptive padding path ------------------------------
    batch2 = 300
    x2 = jax.random.normal(xkey2, (batch2, num_feat), dtype=jnp.float32)
    out2 = jax.block_until_ready(conv_block_model_forward(x2, params, tb_max=128))
    assert out2.shape == (batch2, 1), out2.shape
    ref2 = reference_forward_kernel_precision(x2, params)
    assert jnp.allclose(out2, ref2, atol=1e-7, rtol=5e-2), (out2, ref2)

    print("KERNEL_OK")
</pallas_src>

<mosaic_0001>
module attributes {stable_mosaic.version = 11 : i64} {
  func.func @mlp_kernel(%arg0: i32, %arg1: memref<16x3xf32, #tpu.memory_space<vmem>>, %arg2: memref<3x128xf32, #tpu.memory_space<vmem>>, %arg3: memref<1x128xf32, #tpu.memory_space<vmem>>, %arg4: memref<128x256xbf16, #tpu.memory_space<vmem>>, %arg5: memref<1x256xf32, #tpu.memory_space<vmem>>, %arg6: memref<256x512xbf16, #tpu.memory_space<vmem>>, %arg7: memref<1x512xf32, #tpu.memory_space<vmem>>, %arg8: memref<512x256xbf16, #tpu.memory_space<vmem>>, %arg9: memref<1x256xf32, #tpu.memory_space<vmem>>, %arg10: memref<256x128xbf16, #tpu.memory_space<vmem>>, %arg11: memref<1x128xf32, #tpu.memory_space<vmem>>, %arg12: memref<1x128xf32, #tpu.memory_space<vmem>>, %arg13: memref<1x1xf32, #tpu.memory_space<vmem>>, %arg14: memref<16x1xf32, #tpu.memory_space<vmem>>) attributes {dimension_semantics = [#tpu.dimension_semantics<parallel>], iteration_bounds = array<i64: 1>, scalar_prefetch = 0 : i64, scratch_operands = 0 : i64, tpu.core_type = #tpu.core_type<tc>, window_params = [{transform_indices = @transform_0, window_bounds = array<i64: 16, 3>}, {pipeline_mode = #tpu.pipeline_mode<synchronous>, transform_indices = @transform_1, window_bounds = array<i64: 3, 128>}, {pipeline_mode = #tpu.pipeline_mode<synchronous>, transform_indices = @transform_2, window_bounds = array<i64: 1, 128>}, {pipeline_mode = #tpu.pipeline_mode<synchronous>, transform_indices = @transform_3, window_bounds = array<i64: 128, 256>}, {pipeline_mode = #tpu.pipeline_mode<synchronous>, transform_indices = @transform_4, window_bounds = array<i64: 1, 256>}, {pipeline_mode = #tpu.pipeline_mode<synchronous>, transform_indices = @transform_5, window_bounds = array<i64: 256, 512>}, {pipeline_mode = #tpu.pipeline_mode<synchronous>, transform_indices = @transform_6, window_bounds = array<i64: 1, 512>}, {pipeline_mode = #tpu.pipeline_mode<synchronous>, transform_indices = @transform_7, window_bounds = array<i64: 512, 256>}, {pipeline_mode = #tpu.pipeline_mode<synchronous>, transform_indices = @transform_8, window_bounds = array<i64: 1, 256>}, {pipeline_mode = #tpu.pipeline_mode<synchronous>, transform_indices = @transform_9, window_bounds = array<i64: 256, 128>}, {pipeline_mode = #tpu.pipeline_mode<synchronous>, transform_indices = @transform_10, window_bounds = array<i64: 1, 128>}, {pipeline_mode = #tpu.pipeline_mode<synchronous>, transform_indices = @transform_11, window_bounds = array<i64: 1, 128>}, {pipeline_mode = #tpu.pipeline_mode<synchronous>, transform_indices = @transform_12, window_bounds = array<i64: 1, 1>}, {transform_indices = @transform_13, window_bounds = array<i64: 16, 1>}]} {
    %c0 = arith.constant 0 : index
    %c0_0 = arith.constant 0 : index
    %0 = vector.load %arg1[%c0, %c0_0] : memref<16x3xf32, #tpu.memory_space<vmem>>, vector<16x3xf32>
    %c0_1 = arith.constant 0 : index
    %c0_2 = arith.constant 0 : index
    %1 = vector.load %arg2[%c0_1, %c0_2] : memref<3x128xf32, #tpu.memory_space<vmem>>, vector<3x128xf32>
    %2 = vector.extract_strided_slice %0 {offsets = [0, 0], sizes = [16, 1], strides = [1, 1]} : vector<16x3xf32> to vector<16x1xf32>
    %3 = vector.extract_strided_slice %1 {offsets = [0, 0], sizes = [1, 128], strides = [1, 1]} : vector<3x128xf32> to vector<1x128xf32>
    %4 = vector.broadcast %2 : vector<16x1xf32> to vector<16x128xf32>
    %5 = vector.broadcast %3 : vector<1x128xf32> to vector<16x128xf32>
    %6 = arith.mulf %4, %5 : vector<16x128xf32>
    %c0_3 = arith.constant 0 : index
    %c0_4 = arith.constant 0 : index
    %7 = vector.load %arg3[%c0_3, %c0_4] : memref<1x128xf32, #tpu.memory_space<vmem>>, vector<1x128xf32>
    %8 = vector.broadcast %7 : vector<1x128xf32> to vector<16x128xf32>
    %9 = arith.addf %6, %8 : vector<16x128xf32>
    %10 = vector.extract_strided_slice %0 {offsets = [0, 1], sizes = [16, 1], strides = [1, 1]} : vector<16x3xf32> to vector<16x1xf32>
    %11 = vector.extract_strided_slice %1 {offsets = [1, 0], sizes = [1, 128], strides = [1, 1]} : vector<3x128xf32> to vector<1x128xf32>
    %12 = vector.broadcast %10 : vector<16x1xf32> to vector<16x128xf32>
    %13 = vector.broadcast %11 : vector<1x128xf32> to vector<16x128xf32>
    %14 = arith.mulf %12, %13 : vector<16x128xf32>
    %15 = arith.addf %9, %14 : vector<16x128xf32>
    %16 = vector.extract_strided_slice %0 {offsets = [0, 2], sizes = [16, 1], strides = [1, 1]} : vector<16x3xf32> to vector<16x1xf32>
    %17 = vector.extract_strided_slice %1 {offsets = [2, 0], sizes = [1, 128], strides = [1, 1]} : vector<3x128xf32> to vector<1x128xf32>
    %18 = vector.broadcast %16 : vector<16x1xf32> to vector<16x128xf32>
    %19 = vector.broadcast %17 : vector<1x128xf32> to vector<16x128xf32>
    %20 = arith.mulf %18, %19 : vector<16x128xf32>
    %21 = arith.addf %15, %20 : vector<16x128xf32>
    %cst = arith.constant 0.000000e+00 : f32
    %22 = vector.broadcast %cst : f32 to vector<16x128xf32>
    %23 = arith.maximumf %21, %22 : vector<16x128xf32>
    %24 = arith.truncf %23 : vector<16x128xf32> to vector<16x128xbf16>
    %c0_5 = arith.constant 0 : index
    %c0_6 = arith.constant 0 : index
    %25 = vector.load %arg4[%c0_5, %c0_6] : memref<128x256xbf16, #tpu.memory_space<vmem>>, vector<128x256xbf16>
    %cst_7 = arith.constant dense<0.000000e+00> : vector<16x256xf32>
    %26 = tpu.matmul %24, %25, %cst_7 {dimension_numbers = #tpu.dot_dimension_numbers<[1], [0], [0], [1], [0, 0, 1, 1], [], []>} : vector<16x128xbf16>, vector<128x256xbf16>, vector<16x256xf32> -> vector<16x256xf32>
    %c0_8 = arith.constant 0 : index
    %c0_9 = arith.constant 0 : index
    %27 = vector.load %arg5[%c0_8, %c0_9] : memref<1x256xf32, #tpu.memory_space<vmem>>, vector<1x256xf32>
    %28 = vector.broadcast %27 : vector<1x256xf32> to vector<16x256xf32>
    %29 = arith.addf %26, %28 : vector<16x256xf32>
    %cst_10 = arith.constant 0.000000e+00 : f32
    %30 = vector.broadcast %cst_10 : f32 to vector<16x256xf32>
    %31 = arith.maximumf %29, %30 : vector<16x256xf32>
    %32 = arith.truncf %31 : vector<16x256xf32> to vector<16x256xbf16>
    %c0_11 = arith.constant 0 : index
    %c0_12 = arith.constant 0 : index
    %33 = vector.load %arg6[%c0_11, %c0_12] : memref<256x512xbf16, #tpu.memory_space<vmem>>, vector<256x512xbf16>
    %cst_13 = arith.constant dense<0.000000e+00> : vector<16x512xf32>
    %34 = tpu.matmul %32, %33, %cst_13 {dimension_numbers = #tpu.dot_dimension_numbers<[1], [0], [0], [1], [0, 0, 1, 1], [], []>} : vector<16x256xbf16>, vector<256x512xbf16>, vector<16x512xf32> -> vector<16x512xf32>
    %c0_14 = arith.constant 0 : index
    %c0_15 = arith.constant 0 : index
    %35 = vector.load %arg7[%c0_14, %c0_15] : memref<1x512xf32, #tpu.memory_space<vmem>>, vector<1x512xf32>
    %36 = vector.broadcast %35 : vector<1x512xf32> to vector<16x512xf32>
    %37 = arith.addf %34, %36 : vector<16x512xf32>
    %cst_16 = arith.constant 0.000000e+00 : f32
    %38 = vector.broadcast %cst_16 : f32 to vector<16x512xf32>
    %39 = arith.maximumf %37, %38 : vector<16x512xf32>
    %40 = arith.truncf %39 : vector<16x512xf32> to vector<16x512xbf16>
    %c0_17 = arith.constant 0 : index
    %c0_18 = arith.constant 0 : index
    %41 = vector.load %arg8[%c0_17, %c0_18] : memref<512x256xbf16, #tpu.memory_space<vmem>>, vector<512x256xbf16>
    %cst_19 = arith.constant dense<0.000000e+00> : vector<16x256xf32>
    %42 = tpu.matmul %40, %41, %cst_19 {dimension_numbers = #tpu.dot_dimension_numbers<[1], [0], [0], [1], [0, 0, 1, 1], [], []>} : vector<16x512xbf16>, vector<512x256xbf16>, vector<16x256xf32> -> vector<16x256xf32>
    %c0_20 = arith.constant 0 : index
    %c0_21 = arith.constant 0 : index
    %43 = vector.load %arg9[%c0_20, %c0_21] : memref<1x256xf32, #tpu.memory_space<vmem>>, vector<1x256xf32>
    %44 = vector.broadcast %43 : vector<1x256xf32> to vector<16x256xf32>
    %45 = arith.addf %42, %44 : vector<16x256xf32>
    %cst_22 = arith.constant 0.000000e+00 : f32
    %46 = vector.broadcast %cst_22 : f32 to vector<16x256xf32>
    %47 = arith.maximumf %45, %46 : vector<16x256xf32>
    %48 = arith.truncf %47 : vector<16x256xf32> to vector<16x256xbf16>
    %c0_23 = arith.constant 0 : index
    %c0_24 = arith.constant 0 : index
    %49 = vector.load %arg10[%c0_23, %c0_24] : memref<256x128xbf16, #tpu.memory_space<vmem>>, vector<256x128xbf16>
    %cst_25 = arith.constant dense<0.000000e+00> : vector<16x128xf32>
    %50 = tpu.matmul %48, %49, %cst_25 {dimension_numbers = #tpu.dot_dimension_numbers<[1], [0], [0], [1], [0, 0, 1, 1], [], []>} : vector<16x256xbf16>, vector<256x128xbf16>, vector<16x128xf32> -> vector<16x128xf32>
    %c0_26 = arith.constant 0 : index
    %c0_27 = arith.constant 0 : index
    %51 = vector.load %arg11[%c0_26, %c0_27] : memref<1x128xf32, #tpu.memory_space<vmem>>, vector<1x128xf32>
    %52 = vector.broadcast %51 : vector<1x128xf32> to vector<16x128xf32>
    %53 = arith.addf %50, %52 : vector<16x128xf32>
    %cst_28 = arith.constant 0.000000e+00 : f32
    %54 = vector.broadcast %cst_28 : f32 to vector<16x128xf32>
    %55 = arith.maximumf %53, %54 : vector<16x128xf32>
    %56 = arith.truncf %55 : vector<16x128xf32> to vector<16x128xbf16>
    %57 = arith.extf %56 : vector<16x128xbf16> to vector<16x128xf32>
    %c0_29 = arith.constant 0 : index
    %c0_30 = arith.constant 0 : index
    %58 = vector.load %arg12[%c0_29, %c0_30] : memref<1x128xf32, #tpu.memory_space<vmem>>, vector<1x128xf32>
    %59 = vector.broadcast %58 : vector<1x128xf32> to vector<16x128xf32>
    %60 = arith.mulf %57, %59 : vector<16x128xf32>
    %cst_31 = arith.constant dense<0.000000e+00> : vector<16xf32>
    %61 = vector.multi_reduction <add>, %60, %cst_31 [1] : vector<16x128xf32> to vector<16xf32>
    %62 = vector.shape_cast %61 : vector<16xf32> to vector<16x1xf32>
    %c0_32 = arith.constant 0 : index
    %c0_33 = arith.constant 0 : index
    %63 = vector.load %arg13[%c0_32, %c0_33] : memref<1x1xf32, #tpu.memory_space<vmem>>, vector<1x1xf32>
    %64 = vector.broadcast %63 : vector<1x1xf32> to vector<16x1xf32>
    %65 = arith.addf %62, %64 : vector<16x1xf32>
    %c0_34 = arith.constant 0 : index
    %c0_35 = arith.constant 0 : index
    %66 = vector.load %arg14[%c0_34, %c0_35] : memref<16x1xf32, #tpu.memory_space<vmem>>, vector<16x1xf32>
    tpu.vector_store %arg14[%c0_34, %c0_35], %65 {strides = array<i32>} : memref<16x1xf32, #tpu.memory_space<vmem>>, vector<16x1xf32>,
    return
  }
  func.func @transform_0(%arg0: i32) -> (i32, i32) {
    %c0_i32 = arith.constant 0 : i32
    %c0_i32_0 = arith.constant 0 : i32
    return %arg0, %c0_i32 : i32, i32
  }
  func.func @transform_1(%arg0: i32) -> (i32, i32) {
    %c0_i32 = arith.constant 0 : i32
    %c0_i32_0 = arith.constant 0 : i32
    %c0_i32_1 = arith.constant 0 : i32
    return %c0_i32, %c0_i32_0 : i32, i32
  }
  func.func @transform_2(%arg0: i32) -> (i32, i32) {
    %c0_i32 = arith.constant 0 : i32
    %c0_i32_0 = arith.constant 0 : i32
    %c0_i32_1 = arith.constant 0 : i32
    return %c0_i32, %c0_i32_0 : i32, i32
  }
  func.func @transform_3(%arg0: i32) -> (i32, i32) {
    %c0_i32 = arith.constant 0 : i32
    %c0_i32_0 = arith.constant 0 : i32
    %c0_i32_1 = arith.constant 0 : i32
    return %c0_i32, %c0_i32_0 : i32, i32
  }
  func.func @transform_4(%arg0: i32) -> (i32, i32) {
    %c0_i32 = arith.constant 0 : i32
    %c0_i32_0 = arith.constant 0 : i32
    %c0_i32_1 = arith.constant 0 : i32
    return %c0_i32, %c0_i32_0 : i32, i32
  }
  func.func @transform_5(%arg0: i32) -> (i32, i32) {
    %c0_i32 = arith.constant 0 : i32
    %c0_i32_0 = arith.constant 0 : i32
    %c0_i32_1 = arith.constant 0 : i32
    return %c0_i32, %c0_i32_0 : i32, i32
  }
  func.func @transform_6(%arg0: i32) -> (i32, i32) {
    %c0_i32 = arith.constant 0 : i32
    %c0_i32_0 = arith.constant 0 : i32
    %c0_i32_1 = arith.constant 0 : i32
    return %c0_i32, %c0_i32_0 : i32, i32
  }
  func.func @transform_7(%arg0: i32) -> (i32, i32) {
    %c0_i32 = arith.constant 0 : i32
    %c0_i32_0 = arith.constant 0 : i32
    %c0_i32_1 = arith.constant 0 : i32
    return %c0_i32, %c0_i32_0 : i32, i32
  }
  func.func @transform_8(%arg0: i32) -> (i32, i32) {
    %c0_i32 = arith.constant 0 : i32
    %c0_i32_0 = arith.constant 0 : i32
    %c0_i32_1 = arith.constant 0 : i32
    return %c0_i32, %c0_i32_0 : i32, i32
  }
  func.func @transform_9(%arg0: i32) -> (i32, i32) {
    %c0_i32 = arith.constant 0 : i32
    %c0_i32_0 = arith.constant 0 : i32
    %c0_i32_1 = arith.constant 0 : i32
    return %c0_i32, %c0_i32_0 : i32, i32
  }
  func.func @transform_10(%arg0: i32) -> (i32, i32) {
    %c0_i32 = arith.constant 0 : i32
    %c0_i32_0 = arith.constant 0 : i32
    %c0_i32_1 = arith.constant 0 : i32
    return %c0_i32, %c0_i32_0 : i32, i32
  }
  func.func @transform_11(%arg0: i32) -> (i32, i32) {
    %c0_i32 = arith.constant 0 : i32
    %c0_i32_0 = arith.constant 0 : i32
    %c0_i32_1 = arith.constant 0 : i32
    return %c0_i32, %c0_i32_0 : i32, i32
  }
  func.func @transform_12(%arg0: i32) -> (i32, i32) {
    %c0_i32 = arith.constant 0 : i32
    %c0_i32_0 = arith.constant 0 : i32
    %c0_i32_1 = arith.constant 0 : i32
    return %c0_i32, %c0_i32_0 : i32, i32
  }
  func.func @transform_13(%arg0: i32) -> (i32, i32) {
    %c0_i32 = arith.constant 0 : i32
    %c0_i32_0 = arith.constant 0 : i32
    return %arg0, %c0_i32 : i32, i32
  }
}

</mosaic_0001>

<llo_original>
// kernel: tpu_custom_call.1
$region0: #{tpu_custom_call.1}
  #allocation0 [shape = 'u32[]', space=smem, size = 0x4, offset = 0x4, fixed_abs, tag = 'smem constant byte address 0x4 - core index']
  #allocation1 [shape = 'u32[144,128]{1,0:T(1,128)}', space=vmem, size = 0x12000, scoped, tag = 'internal scratch']
  #allocation2 [shape = 'f32[1,1]{1,0:T(1,128)S(1)}', space=vmem, size = 0x200, scoped, tag = 'scoped memory for tpu_custom_call.1']
  %s0 = inlined_call_operand.vmem [shape: f32[16,3], index: 0, kind: input, shape index: {}]
  %s1 = inlined_call_operand.vmem [shape: f32[3,128], index: 1, kind: input, shape index: {}]
  %s2 = inlined_call_operand.vmem [shape: f32[1,128], index: 2, kind: input, shape index: {}]
  %s3 = inlined_call_operand.hbm [shape: bf16[128,256], index: 3, kind: input, shape index: {}]
  %s4 = inlined_call_operand.vmem [shape: f32[1,256], index: 4, kind: input, shape index: {}]
  %s5 = inlined_call_operand.hbm [shape: bf16[256,512], index: 5, kind: input, shape index: {}]
  %s6 = inlined_call_operand.vmem [shape: f32[1,512], index: 6, kind: input, shape index: {}]
  %s7 = inlined_call_operand.hbm [shape: bf16[512,256], index: 7, kind: input, shape index: {}]
  %s8 = inlined_call_operand.vmem [shape: f32[1,256], index: 8, kind: input, shape index: {}]
  %s9 = inlined_call_operand.hbm [shape: bf16[256,128], index: 9, kind: input, shape index: {}]
  %s10 = inlined_call_operand.vmem [shape: f32[1,128], index: 10, kind: input, shape index: {}]
  %s11 = inlined_call_operand.vmem [shape: f32[1,128], index: 11, kind: input, shape index: {}]
  %s12 = inlined_call_operand.<no memory space> [shape: f32[1,1], index: 12, kind: input, shape index: {}]
  %s13 = inlined_call_operand.vmem [shape: f32[16,1], index: 13, kind: output, shape index: {}]
  %s14 = sld [smem:[#allocation0]]
  $region78: #{tpu_custom_call.1} parent=0
    _
  %s16 = ssub.s32 1, %s14
  %s17 = scalar_select 0, %s16, %s14
  %v18 = vstv %s12
  %19 = vst [vmem:[#allocation2] sm:$0x1] %v18
  $region1: #{tpu_custom_call.1} parent=0
    #allocation3 [shape = 'u8[65536]{0}', space=vmem, size = 0x10000, scoped, tag = 'input window, operand 3, single buffered']
    #allocation4 [shape = 's32[1]{0}', space=sflag, size = 0x4, scoped, tag = 'scoped memory for tpu_custom_call.1']
    #allocation5 [shape = 'u8[262144]{0}', space=vmem, size = 0x40000, scoped, tag = 'input window, operand 5, single buffered']
    #allocation6 [shape = 's32[1]{0}', space=sflag, size = 0x4, scoped, tag = 'scoped memory for tpu_custom_call.1']
    #allocation7 [shape = 'u8[262144]{0}', space=vmem, size = 0x40000, scoped, tag = 'input window, operand 7, single buffered']
    #allocation8 [shape = 'u8[65536]{0}', space=vmem, size = 0x10000, scoped, tag = 'input window, operand 9, single buffered']
    #allocation9 [shape = 's32[1]{0}', space=sflag, size = 0x4, scoped, tag = 'scoped memory for tpu_custom_call.1']
    %20 = vsyncpa [#allocation4], 0
    %21 = vsyncpa [#allocation6], 0
    %22 = vsyncpa [#allocation9], 0
    // Predicated region
    $region2: #{tpu_custom_call.1} parent=1 // pred_check
      _
    $region3: #{tpu_custom_call.1} parent=1 // pred_check_branch
      %24 = sbr.rel (0) target = $region5
    $region4: #{tpu_custom_call.1} parent=1 // pred_region
      _
    $region5: #{tpu_custom_call.1} parent=1 // pred_fallthru
      _
    // Predicated region
    $region6: #{tpu_custom_call.1} parent=1 // pred_check
      _
    $region7: #{tpu_custom_call.1} parent=1 // pred_check_branch
      %26 = sbr.rel (0) target = $region9
    $region8: #{tpu_custom_call.1} parent=1 // pred_region
      _
    $region9: #{tpu_custom_call.1} parent=1 // pred_fallthru
      _
    // Predicated region
    $region10: #{tpu_custom_call.1} parent=1 // pred_check
      _
    $region11: #{tpu_custom_call.1} parent=1 // pred_check_branch
      %28 = sbr.rel (0) target = $region13
    $region12: #{tpu_custom_call.1} parent=1 // pred_region
      _
    $region13: #{tpu_custom_call.1} parent=1 // pred_fallthru
      _
    // Predicated region
    $region14: #{tpu_custom_call.1} parent=1 // pred_check
      _
    $region15: #{tpu_custom_call.1} parent=1 // pred_check_branch
      %30 = sbr.rel (0) target = $region17
    $region16: #{tpu_custom_call.1} parent=1 // pred_region
      %s32 = ssub.s32 2048, 2048
      %33 = vsyncadd [#allocation4], %s32
      %s34 = sshll.u32 [#allocation3], 4
      %s35 = int_to_ptr.vmem [resolvable:$true] %s34
      %40 = dma.hbm_to_vmem [thread:$0]  %s3, 2048, %s35, [#allocation4], 128, 128, 8
    $region17: #{tpu_custom_call.1} parent=1 // pred_fallthru
      _
    // Predicated region
    $region18: #{tpu_custom_call.1} parent=1 // pred_check
      _
    $region19: #{tpu_custom_call.1} parent=1 // pred_check_branch
      %42 = sbr.rel (0) target = $region21
    $region20: #{tpu_custom_call.1} parent=1 // pred_region
      _
    $region21: #{tpu_custom_call.1} parent=1 // pred_fallthru
      _
    // Predicated region
    $region22: #{tpu_custom_call.1} parent=1 // pred_check
      _
    $region23: #{tpu_custom_call.1} parent=1 // pred_check_branch
      %44 = sbr.rel (0) target = $region25
    $region24: #{tpu_custom_call.1} parent=1 // pred_region
      %s46 = ssub.s32 8192, 8192
      %47 = vsyncadd [#allocation6], %s46
      %s48 = sshll.u32 [#allocation5], 4
      %s49 = int_to_ptr.vmem [resolvable:$true] %s48
      %54 = dma.hbm_to_vmem [thread:$0]  %s5, 8192, %s49, [#allocation6], 256, 256, 16
    $region25: #{tpu_custom_call.1} parent=1 // pred_fallthru
      _
    // Predicated region
    $region26: #{tpu_custom_call.1} parent=1 // pred_check
      _
    $region27: #{tpu_custom_call.1} parent=1 // pred_check_branch
      %56 = sbr.rel (0) target = $region29
    $region28: #{tpu_custom_call.1} parent=1 // pred_region
      _
    $region29: #{tpu_custom_call.1} parent=1 // pred_fallthru
      _
    // Predicated region
    $region30: #{tpu_custom_call.1} parent=1 // pred_check
      _
    $region31: #{tpu_custom_call.1} parent=1 // pred_check_branch
      %58 = sbr.rel (0) target = $region33
    $region32: #{tpu_custom_call.1} parent=1 // pred_region
      %s60 = ssub.s32 8192, 8192
      %61 = vsyncadd [#allocation6], %s60
      %s62 = sshll.u32 [#allocation7], 4
      %s63 = int_to_ptr.vmem [resolvable:$true] %s62
      %68 = dma.hbm_to_vmem [thread:$0]  %s7, 8192, %s63, [#allocation6], 128, 128, 8
    $region33: #{tpu_custom_call.1} parent=1 // pred_fallthru
      _
    // Predicated region
    $region34: #{tpu_custom_call.1} parent=1 // pred_check
      _
    $region35: #{tpu_custom_call.1} parent=1 // pred_check_branch
      %70 = sbr.rel (0) target = $region37
    $region36: #{tpu_custom_call.1} parent=1 // pred_region
      _
    $region37: #{tpu_custom_call.1} parent=1 // pred_fallthru
      _
    // Predicated region
    $region38: #{tpu_custom_call.1} parent=1 // pred_check
      _
    $region39: #{tpu_custom_call.1} parent=1 // pred_check_branch
      %72 = sbr.rel (0) target = $region41
    $region40: #{tpu_custom_call.1} parent=1 // pred_region
      %s74 = ssub.s32 2048, 2048
      %75 = vsyncadd [#allocation9], %s74
      %s76 = sshll.u32 [#allocation8], 4
      %s77 = int_to_ptr.vmem [resolvable:$true] %s76
      %82 = dma.hbm_to_vmem [thread:$0]  %s9, 2048, %s77, [#allocation9], 64, 64, 4
    $region41: #{tpu_custom_call.1} parent=1 // pred_fallthru
      _
    // Predicated region
    $region42: #{tpu_custom_call.1} parent=1 // pred_check
      _
    $region43: #{tpu_custom_call.1} parent=1 // pred_check_branch
      %84 = sbr.rel (0) target = $region45
    $region44: #{tpu_custom_call.1} parent=1 // pred_region
      _
    $region45: #{tpu_custom_call.1} parent=1 // pred_fallthru
      _
    // Predicated region
    $region46: #{tpu_custom_call.1} parent=1 // pred_check
      _
    $region47: #{tpu_custom_call.1} parent=1 // pred_check_branch
      %86 = sbr.rel (0) target = $region49
    $region48: #{tpu_custom_call.1} parent=1 // pred_region
      _
    $region49: #{tpu_custom_call.1} parent=1 // pred_fallthru
      _
    // Predicated region
    $region50: #{tpu_custom_call.1} parent=1 // pred_check
      _
    $region51: #{tpu_custom_call.1} parent=1 // pred_check_branch
      %88 = sbr.rel (0) target = $region53
    $region52: #{tpu_custom_call.1} parent=1 // pred_region
      _
    $region53: #{tpu_custom_call.1} parent=1 // pred_fallthru
      _
    // Predicated region
    $region54: #{tpu_custom_call.1} parent=1 // pred_check
      _
    $region55: #{tpu_custom_call.1} parent=1 // pred_check_branch
      %90 = sbr.rel (0) target = $region57
    $region56: #{tpu_custom_call.1} parent=1 // pred_region
      %91 = dma.done [#allocation4], 2048
    $region57: #{tpu_custom_call.1} parent=1 // pred_fallthru
      _
    // Predicated region
    $region58: #{tpu_custom_call.1} parent=1 // pred_check
      _
    $region59: #{tpu_custom_call.1} parent=1 // pred_check_branch
      %93 = sbr.rel (0) target = $region61
    $region60: #{tpu_custom_call.1} parent=1 // pred_region
      %94 = dma.done [#allocation6], 8192
    $region61: #{tpu_custom_call.1} parent=1 // pred_fallthru
      _
    // Predicated region
    $region62: #{tpu_custom_call.1} parent=1 // pred_check
      _
    $region63: #{tpu_custom_call.1} parent=1 // pred_check_branch
      %96 = sbr.rel (0) target = $region65
    $region64: #{tpu_custom_call.1} parent=1 // pred_region
      %97 = dma.done [#allocation6], 8192
    $region65: #{tpu_custom_call.1} parent=1 // pred_fallthru
      _
    // Predicated region
    $region66: #{tpu_custom_call.1} parent=1 // pred_check
      _
    $region67: #{tpu_custom_call.1} parent=1 // pred_check_branch
      %99 = sbr.rel (0) target = $region69
    $region68: #{tpu_custom_call.1} parent=1 // pred_region
      %100 = dma.done [#allocation9], 2048
    $region69: #{tpu_custom_call.1} parent=1 // pred_fallthru
      _
    %v102 = vld [vmem:[%s0] sm:$0xff]
    %v103 = vld [vmem:[%s0 + $0x8] sm:$0xff]
    %v104 = vld [vmem:[%s1] sm:$0x7]
    %106 = vset.pattern.permute.xlu0 0
    %107 = vperm.xlu0 %106, %v102
    %v108 = vpop.permute.xlu0 %107
    %111 = vset.pattern.permute.xlu0 0
    %112 = vperm.xlu0 %111, %v103
    %v113 = vpop.permute.xlu0 %112
    %v115 = vlaneseq
    %v116 = vshrl.u32 %v115, 7
    %v117 = vsub.s32 0, %v116
    %v118 = vrot.slane %v104, %v117
    %v119 = vmul.f32 %v108, %v118
    %v120 = vmul.f32 %v113, %v118
    %v121 = vld [vmem:[%s2] sm:$0x1]
    %v123 = vlaneseq
    %v124 = vshrl.u32 %v123, 7
    %v125 = vsub.s32 0, %v124
    %v126 = vrot.slane %v121, %v125
    %v128 = vadd.f32 %v119, %v126
    %v129 = vadd.f32 %v120, %v126
    %130 = vset.pattern.permute.xlu0 1
    %131 = vperm.xlu0 %130, %v102
    %v132 = vpop.permute.xlu0 %131
    %134 = vset.pattern.permute.xlu0 1
    %135 = vperm.xlu0 %134, %v103
    %v136 = vpop.permute.xlu0 %135
    %v138 = vlaneseq
    %v139 = vshrl.u32 %v138, 7
    %v140 = vsub.s32 1, %v139
    %v141 = vrot.slane %v104, %v140
    %v142 = vmul.f32 %v132, %v141
    %v143 = vmul.f32 %v136, %v141
    %v144 = vadd.f32 %v128, %v142
    %v145 = vadd.f32 %v129, %v143
    %146 = vset.pattern.permute.xlu0 2
    %147 = vperm.xlu0 %146, %v102
    %v148 = vpop.permute.xlu0 %147
    %150 = vset.pattern.permute.xlu0 2
    %151 = vperm.xlu0 %150, %v103
    %v152 = vpop.permute.xlu0 %151
    %v154 = vlaneseq
    %v155 = vshrl.u32 %v154, 7
    %v156 = vsub.s32 2, %v155
    %v157 = vrot.slane %v104, %v156
    %v158 = vmul.f32 %v148, %v157
    %v159 = vmul.f32 %v152, %v157
    %v160 = vadd.f32 %v144, %v158
    %v161 = vadd.f32 %v145, %v159
    %v162 = vmax.f32 %v160, 0.0
    %v163 = vmax.f32 %v161, 0.0
    %v164 = vpack.c.bf16 %v163, %v162
    %v165 = vld [vmem:[#allocation3] sm:$0xff]
    %v166 = vld [vmem:[#allocation3 + $0x8] sm:$0xff]
    %v167 = vld [vmem:[#allocation3 + $0x10] sm:$0xff]
    %v168 = vld [vmem:[#allocation3 + $0x18] sm:$0xff]
    %v169 = vld [vmem:[#allocation3 + $0x20] sm:$0xff]
    %v170 = vld [vmem:[#allocation3 + $0x28] sm:$0xff]
    %v171 = vld [vmem:[#allocation3 + $0x30] sm:$0xff]
    %v172 = vld [vmem:[#allocation3 + $0x38] sm:$0xff]
    %v173 = vld [vmem:[#allocation3 + $0x40] sm:$0xff]
    %v174 = vld [vmem:[#allocation3 + $0x48] sm:$0xff]
    %v175 = vld [vmem:[#allocation3 + $0x50] sm:$0xff]
    %v176 = vld [vmem:[#allocation3 + $0x58] sm:$0xff]
    %v177 = vld [vmem:[#allocation3 + $0x60] sm:$0xff]
    %v178 = vld [vmem:[#allocation3 + $0x68] sm:$0xff]
    %v179 = vld [vmem:[#allocation3 + $0x70] sm:$0xff]
    %v180 = vld [vmem:[#allocation3 + $0x78] sm:$0xff]
    %v181 = vld [vmem:[%s4] sm:$0x3]
    %v183 = vlaneseq
    %v184 = vshrl.u32 %v183, 7
    %v185 = vsub.s32 0, %v184
    %v186 = vrot.slane %v181, %v185
    %v187 = vlaneseq
    %v188 = vshrl.u32 %v187, 7
    %v189 = vsub.s32 1, %v188
    %v190 = vrot.slane %v181, %v189
    %v209 = vunpack.c.l.b16 %v165
    %v210 = vunpack.c.h.b16 %v165
    %v211 = vunpack.c.l.b16 %v166
    %v212 = vunpack.c.h.b16 %v166
    %v213 = vunpack.c.l.b16 %v167
    %v214 = vunpack.c.h.b16 %v167
    %v215 = vunpack.c.l.b16 %v168
    %v216 = vunpack.c.h.b16 %v168
    %v217 = vunpack.c.l.b16 %v169
    %v218 = vunpack.c.h.b16 %v169
    %v219 = vunpack.c.l.b16 %v170
    %v220 = vunpack.c.h.b16 %v170
    %v221 = vunpack.c.l.b16 %v171
    %v222 = vunpack.c.h.b16 %v171
    %v223 = vunpack.c.l.b16 %v172
    %v224 = vunpack.c.h.b16 %v172
    %v225 = vunpack.c.l.b16 %v173
    %v226 = vunpack.c.h.b16 %v173
    %v227 = vunpack.c.l.b16 %v174
    %v228 = vunpack.c.h.b16 %v174
    %v229 = vunpack.c.l.b16 %v175
    %v230 = vunpack.c.h.b16 %v175
    %v231 = vunpack.c.l.b16 %v176
    %v232 = vunpack.c.h.b16 %v176
    %v233 = vunpack.c.l.b16 %v177
    %v234 = vunpack.c.h.b16 %v177
    %v235 = vunpack.c.l.b16 %v178
    %v236 = vunpack.c.h.b16 %v178
    %v237 = vunpack.c.l.b16 %v179
    %v238 = vunpack.c.h.b16 %v179
    %v239 = vunpack.c.l.b16 %v180
    %v240 = vunpack.c.h.b16 %v180
    %v241 = vpack.c.b16 %v211, %v209
    %v242 = vpack.c.b16 %v212, %v210
    %v243 = vpack.c.b16 %v215, %v213
    %v244 = vpack.c.b16 %v216, %v214
    %v245 = vpack.c.b16 %v219, %v217
    %v246 = vpack.c.b16 %v220, %v218
    %v247 = vpack.c.b16 %v223, %v221
    %v248 = vpack.c.b16 %v224, %v222
    %v249 = vpack.c.b16 %v227, %v225
    %v250 = vpack.c.b16 %v228, %v226
    %v251 = vpack.c.b16 %v231, %v229
    %v252 = vpack.c.b16 %v232, %v230
    %v253 = vpack.c.b16 %v235, %v233
    %v254 = vpack.c.b16 %v236, %v234
    %v255 = vpack.c.b16 %v239, %v237
    %v256 = vpack.c.b16 %v240, %v238
    %273 = vmatprep.subr.bf16.mxu0 %v242
    %274 = vmatpush1.bf16.msra.mxu0 %v241
    %275 = vmatprep.subr.bf16.mxu0 %v244
    %276 = vmatpush1.bf16.msra.mxu0 %v243
    %277 = vmatprep.subr.bf16.mxu0 %v246
    %278 = vmatpush1.bf16.msra.mxu0 %v245
    %279 = vmatprep.subr.bf16.mxu0 %v248
    %280 = vmatpush1.bf16.msra.mxu0 %v247
    %281 = vmatprep.subr.bf16.mxu0 %v250
    %282 = vmatpush1.bf16.msra.mxu0 %v249
    %283 = vmatprep.subr.bf16.mxu0 %v252
    %284 = vmatpush1.bf16.msra.mxu0 %v251
    %285 = vmatprep.subr.bf16.mxu0 %v254
    %286 = vmatpush1.bf16.msra.mxu0 %v253
    %287 = vmatprep.subr.bf16.mxu0 %v256
    %288 = vmatpush1.bf16.msra.mxu0 %v255
    %289 = vmatprep.subr.bf16.mxu0 0
    %290 = vmatpush1.bf16.msra.mxu0 0
    %291 = vmatprep.subr.bf16.mxu0 0
    %292 = vmatpush1.bf16.msra.mxu0 0
    %293 = vmatprep.subr.bf16.mxu0 0
    %294 = vmatpush1.bf16.msra.mxu0 0
    %295 = vmatprep.subr.bf16.mxu0 0
    %296 = vmatpush1.bf16.msra.mxu0 0
    %297 = vmatprep.subr.bf16.mxu0 0
    %298 = vmatpush1.bf16.msra.mxu0 0
    %299 = vmatprep.subr.bf16.mxu0 0
    %300 = vmatpush1.bf16.msra.mxu0 0
    %301 = vmatprep.subr.bf16.mxu0 0
    %302 = vmatpush1.bf16.msra.mxu0 0
    %303 = vmatprep.subr.bf16.mxu0 0
    %304 = vmatpush1.bf16.msra.mxu0 0
    %305 = vmatprep.mubr.bf16.mxu0 0
    %306 = vmatmul.mubr.bf16.gmra.mrb[0].mxu0 %v164
    %v307 = vpop.f32.mrb[0].mxu0
    %v308 = vadd.f32 %v186, %v307
    %v309 = vpop.f32.mrb[0].mxu0
    %v310 = vadd.f32 %v190, %v309
    %v311 = vpop.f32.mrb[0].mxu0
    %v312 = vadd.f32 %v186, %v311
    %v313 = vpop.f32.mrb[0].mxu0
    %v314 = vadd.f32 %v190, %v313
    %315 = vdwg.mxu0
    %v316 = vmax.f32 %v308, 0.0
    %v317 = vmax.f32 %v310, 0.0
    %v318 = vmax.f32 %v312, 0.0
    %v319 = vmax.f32 %v314, 0.0
    %v320 = vpack.c.bf16 %v318, %v316
    %v321 = vpack.c.bf16 %v319, %v317
    %v322 = vld [vmem:[#allocation5] sm:$0xff]
    %v323 = vld [vmem:[#allocation5 + $0x8] sm:$0xff]
    %v324 = vld [vmem:[#allocation5 + $0x10] sm:$0xff]
    %v325 = vld [vmem:[#allocation5 + $0x18] sm:$0xff]
    %v326 = vld [vmem:[#allocation5 + $0x20] sm:$0xff]
    %v327 = vld [vmem:[#allocation5 + $0x28] sm:$0xff]
    %v328 = vld [vmem:[#allocation5 + $0x30] sm:$0xff]
    %v329 = vld [vmem:[#allocation5 + $0x38] sm:$0xff]
    %v330 = vld [vmem:[#allocation5 + $0x40] sm:$0xff]
    %v331 = vld [vmem:[#allocation5 + $0x48] sm:$0xff]
    %v332 = vld [vmem:[#allocation5 + $0x50] sm:$0xff]
    %v333 = vld [vmem:[#allocation5 + $0x58] sm:$0xff]
    %v334 = vld [vmem:[#allocation5 + $0x60] sm:$0xff]
    %v335 = vld [vmem:[#allocation5 + $0x68] sm:$0xff]
    %v336 = vld [vmem:[#allocation5 + $0x70] sm:$0xff]
    %v337 = vld [vmem:[#allocation5 + $0x78] sm:$0xff]
    %v338 = vld [vmem:[#allocation5 + $0x80] sm:$0xff]
    %v339 = vld [vmem:[#allocation5 + $0x88] sm:$0xff]
    %v340 = vld [vmem:[#allocation5 + $0x90] sm:$0xff]
    %v341 = vld [vmem:[#allocation5 + $0x98] sm:$0xff]
    %v342 = vld [vmem:[#allocation5 + $0xa0] sm:$0xff]
    %v343 = vld [vmem:[#allocation5 + $0xa8] sm:$0xff]
    %v344 = vld [vmem:[#allocation5 + $0xb0] sm:$0xff]
    %v345 = vld [vmem:[#allocation5 + $0xb8] sm:$0xff]
    %v346 = vld [vmem:[#allocation5 + $0xc0] sm:$0xff]
    %v347 = vld [vmem:[#allocation5 + $0xc8] sm:$0xff]
    %v348 = vld [vmem:[#allocation5 + $0xd0] sm:$0xff]
    %v349 = vld [vmem:[#allocation5 + $0xd8] sm:$0xff]
    %v350 = vld [vmem:[#allocation5 + $0xe0] sm:$0xff]
    %v351 = vld [vmem:[#allocation5 + $0xe8] sm:$0xff]
    %v352 = vld [vmem:[#allocation5 + $0xf0] sm:$0xff]
    %v353 = vld [vmem:[#allocation5 + $0xf8] sm:$0xff]
    %v354 = vld [vmem:[#allocation5 + $0x100] sm:$0xff]
    %v355 = vld [vmem:[#allocation5 + $0x108] sm:$0xff]
    %v356 = vld [vmem:[#allocation5 + $0x110] sm:$0xff]
    %v357 = vld [vmem:[#allocation5 + $0x118] sm:$0xff]
    %v358 = vld [vmem:[#allocation5 + $0x120] sm:$0xff]
    %v359 = vld [vmem:[#allocation5 + $0x128] sm:$0xff]
    %v360 = vld [vmem:[#allocation5 + $0x130] sm:$0xff]
    %v361 = vld [vmem:[#allocation5 + $0x138] sm:$0xff]
    %v362 = vld [vmem:[#allocation5 + $0x140] sm:$0xff]
    %v363 = vld [vmem:[#allocation5 + $0x148] sm:$0xff]
    %v364 = vld [vmem:[#allocation5 + $0x150] sm:$0xff]
    %v365 = vld [vmem:[#allocation5 + $0x158] sm:$0xff]
    %v366 = vld [vmem:[#allocation5 + $0x160] sm:$0xff]
    %v367 = vld [vmem:[#allocation5 + $0x168] sm:$0xff]
    %v368 = vld [vmem:[#allocation5 + $0x170] sm:$0xff]
    %v369 = vld [vmem:[#allocation5 + $0x178] sm:$0xff]
    %v370 = vld [vmem:[#allocation5 + $0x180] sm:$0xff]
    %v371 = vld [vmem:[#allocation5 + $0x188] sm:$0xff]
    %v372 = vld [vmem:[#allocation5 + $0x190] sm:$0xff]
    %v373 = vld [vmem:[#allocation5 + $0x198] sm:$0xff]
    %v374 = vld [vmem:[#allocation5 + $0x1a0] sm:$0xff]
    %v375 = vld [vmem:[#allocation5 + $0x1a8] sm:$0xff]
    %v376 = vld [vmem:[#allocation5 + $0x1b0] sm:$0xff]
    %v377 = vld [vmem:[#allocation5 + $0x1b8] sm:$0xff]
    %v378 = vld [vmem:[#allocation5 + $0x1c0] sm:$0xff]
    %v379 = vld [vmem:[#allocation5 + $0x1c8] sm:$0xff]
    %v380 = vld [vmem:[#allocation5 + $0x1d0] sm:$0xff]
    %v381 = vld [vmem:[#allocation5 + $0x1d8] sm:$0xff]
    %v382 = vld [vmem:[#allocation5 + $0x1e0] sm:$0xff]
    %v383 = vld [vmem:[#allocation5 + $0x1e8] sm:$0xff]
    %v384 = vld [vmem:[#allocation5 + $0x1f0] sm:$0xff]
    %v385 = vld [vmem:[#allocation5 + $0x1f8] sm:$0xff]
    %v386 = vld [vmem:[%s6] sm:$0xf]
    %v388 = vlaneseq
    %v389 = vshrl.u32 %v388, 7
    %v390 = vsub.s32 0, %v389
    %v391 = vrot.slane %v386, %v390
    %v392 = vlaneseq
    %v393 = vshrl.u32 %v392, 7
    %v394 = vsub.s32 1, %v393
    %v395 = vrot.slane %v386, %v394
    %v396 = vlaneseq
    %v397 = vshrl.u32 %v396, 7
    %v398 = vsub.s32 2, %v397
    %v399 = vrot.slane %v386, %v398
    %v400 = vlaneseq
    %v401 = vshrl.u32 %v400, 7
    %v402 = vsub.s32 3, %v401
    %v403 = vrot.slane %v386, %v402
    %v472 = vunpack.c.l.b16 %v322
    %v473 = vunpack.c.h.b16 %v322
    %v474 = vunpack.c.l.b16 %v323
    %v475 = vunpack.c.h.b16 %v323
    %v476 = vunpack.c.l.b16 %v324
    %v477 = vunpack.c.h.b16 %v324
    %v478 = vunpack.c.l.b16 %v325
    %v479 = vunpack.c.h.b16 %v325
    %v480 = vunpack.c.l.b16 %v326
    %v481 = vunpack.c.h.b16 %v326
    %v482 = vunpack.c.l.b16 %v327
    %v483 = vunpack.c.h.b16 %v327
    %v484 = vunpack.c.l.b16 %v328
    %v485 = vunpack.c.h.b16 %v328
    %v486 = vunpack.c.l.b16 %v329
    %v487 = vunpack.c.h.b16 %v329
    %v488 = vunpack.c.l.b16 %v330
    %v489 = vunpack.c.h.b16 %v330
    %v490 = vunpack.c.l.b16 %v331
    %v491 = vunpack.c.h.b16 %v331
    %v492 = vunpack.c.l.b16 %v332
    %v493 = vunpack.c.h.b16 %v332
    %v494 = vunpack.c.l.b16 %v333
    %v495 = vunpack.c.h.b16 %v333
    %v496 = vunpack.c.l.b16 %v334
    %v497 = vunpack.c.h.b16 %v334
    %v498 = vunpack.c.l.b16 %v335
    %v499 = vunpack.c.h.b16 %v335
    %v500 = vunpack.c.l.b16 %v336
    %v501 = vunpack.c.h.b16 %v336
    %v502 = vunpack.c.l.b16 %v337
    %v503 = vunpack.c.h.b16 %v337
    %v504 = vunpack.c.l.b16 %v338
    %v505 = vunpack.c.h.b16 %v338
    %v506 = vunpack.c.l.b16 %v339
    %v507 = vunpack.c.h.b16 %v339
    %v508 = vunpack.c.l.b16 %v340
    %v509 = vunpack.c.h.b16 %v340
    %v510 = vunpack.c.l.b16 %v341
    %v511 = vunpack.c.h.b16 %v341
    %v512 = vunpack.c.l.b16 %v342
    %v513 = vunpack.c.h.b16 %v342
    %v514 = vunpack.c.l.b16 %v343
    %v515 = vunpack.c.h.b16 %v343
    %v516 = vunpack.c.l.b16 %v344
    %v517 = vunpack.c.h.b16 %v344
    %v518 = vunpack.c.l.b16 %v345
    %v519 = vunpack.c.h.b16 %v345
    %v520 = vunpack.c.l.b16 %v346
    %v521 = vunpack.c.h.b16 %v346
    %v522 = vunpack.c.l.b16 %v347
    %v523 = vunpack.c.h.b16 %v347
    %v524 = vunpack.c.l.b16 %v348
    %v525 = vunpack.c.h.b16 %v348
    %v526 = vunpack.c.l.b16 %v349
    %v527 = vunpack.c.h.b16 %v349
    %v528 = vunpack.c.l.b16 %v350
    %v529 = vunpack.c.h.b16 %v350
    %v530 = vunpack.c.l.b16 %v351
    %v531 = vunpack.c.h.b16 %v351
    %v532 = vunpack.c.l.b16 %v352
    %v533 = vunpack.c.h.b16 %v352
    %v534 = vunpack.c.l.b16 %v353
    %v535 = vunpack.c.h.b16 %v353
    %v536 = vunpack.c.l.b16 %v354
    %v537 = vunpack.c.h.b16 %v354
    %v538 = vunpack.c.l.b16 %v355
    %v539 = vunpack.c.h.b16 %v355
    %v540 = vunpack.c.l.b16 %v356
    %v541 = vunpack.c.h.b16 %v356
    %v542 = vunpack.c.l.b16 %v357
    %v543 = vunpack.c.h.b16 %v357
    %v544 = vunpack.c.l.b16 %v358
    %v545 = vunpack.c.h.b16 %v358
    %v546 = vunpack.c.l.b16 %v359
    %v547 = vunpack.c.h.b16 %v359
    %v548 = vunpack.c.l.b16 %v360
    %v549 = vunpack.c.h.b16 %v360
    %v550 = vunpack.c.l.b16 %v361
    %v551 = vunpack.c.h.b16 %v361
    %v552 = vunpack.c.l.b16 %v362
    %v553 = vunpack.c.h.b16 %v362
    %v554 = vunpack.c.l.b16 %v363
    %v555 = vunpack.c.h.b16 %v363
    %v556 = vunpack.c.l.b16 %v364
    %v557 = vunpack.c.h.b16 %v364
    %v558 = vunpack.c.l.b16 %v365
    %v559 = vunpack.c.h.b16 %v365
    %v560 = vunpack.c.l.b16 %v366
    %v561 = vunpack.c.h.b16 %v366
    %v562 = vunpack.c.l.b16 %v367
    %v563 = vunpack.c.h.b16 %v367
    %v564 = vunpack.c.l.b16 %v368
    %v565 = vunpack.c.h.b16 %v368
    %v566 = vunpack.c.l.b16 %v369
    %v567 = vunpack.c.h.b16 %v369
    %v568 = vunpack.c.l.b16 %v370
    %v569 = vunpack.c.h.b16 %v370
    %v570 = vunpack.c.l.b16 %v371
    %v571 = vunpack.c.h.b16 %v371
    %v572 = vunpack.c.l.b16 %v372
    %v573 = vunpack.c.h.b16 %v372
    %v574 = vunpack.c.l.b16 %v373
    %v575 = vunpack.c.h.b16 %v373
    %v576 = vunpack.c.l.b16 %v374
    %v577 = vunpack.c.h.b16 %v374
    %v578 = vunpack.c.l.b16 %v375
    %v579 = vunpack.c.h.b16 %v375
    %v580 = vunpack.c.l.b16 %v376
    %v581 = vunpack.c.h.b16 %v376
    %v582 = vunpack.c.l.b16 %v377
    %v583 = vunpack.c.h.b16 %v377
    %v584 = vunpack.c.l.b16 %v378
    %v585 = vunpack.c.h.b16 %v378
    %v586 = vunpack.c.l.b16 %v379
    %v587 = vunpack.c.h.b16 %v379
    %v588 = vunpack.c.l.b16 %v380
    %v589 = vunpack.c.h.b16 %v380
    %v590 = vunpack.c.l.b16 %v381
    %v591 = vunpack.c.h.b16 %v381
    %v592 = vunpack.c.l.b16 %v382
    %v593 = vunpack.c.h.b16 %v382
    %v594 = vunpack.c.l.b16 %v383
    %v595 = vunpack.c.h.b16 %v383
    %v596 = vunpack.c.l.b16 %v384
    %v597 = vunpack.c.h.b16 %v384
    %v598 = vunpack.c.l.b16 %v385
    %v599 = vunpack.c.h.b16 %v385
    %v600 = vpack.c.b16 %v476, %v472
    %v601 = vpack.c.b16 %v477, %v473
    %v602 = vpack.c.b16 %v478, %v474
    %v603 = vpack.c.b16 %v479, %v475
    %v604 = vpack.c.b16 %v484, %v480
    %v605 = vpack.c.b16 %v485, %v481
    %v606 = vpack.c.b16 %v486, %v482
    %v607 = vpack.c.b16 %v487, %v483
    %v608 = vpack.c.b16 %v492, %v488
    %v609 = vpack.c.b16 %v493, %v489
    %v610 = vpack.c.b16 %v494, %v490
    %v611 = vpack.c.b16 %v495, %v491
    %v612 = vpack.c.b16 %v500, %v496
    %v613 = vpack.c.b16 %v501, %v497
    %v614 = vpack.c.b16 %v502, %v498
    %v615 = vpack.c.b16 %v503, %v499
    %v616 = vpack.c.b16 %v508, %v504
    %v617 = vpack.c.b16 %v509, %v505
    %v618 = vpack.c.b16 %v510, %v506
    %v619 = vpack.c.b16 %v511, %v507
    %v620 = vpack.c.b16 %v516, %v512
    %v621 = vpack.c.b16 %v517, %v513
    %v622 = vpack.c.b16 %v518, %v514
    %v623 = vpack.c.b16 %v519, %v515
    %v624 = vpack.c.b16 %v524, %v520
    %v625 = vpack.c.b16 %v525, %v521
    %v626 = vpack.c.b16 %v526, %v522
    %v627 = vpack.c.b16 %v527, %v523
    %v628 = vpack.c.b16 %v532, %v528
    %v629 = vpack.c.b16 %v533, %v529
    %v630 = vpack.c.b16 %v534, %v530
    %v631 = vpack.c.b16 %v535, %v531
    %v632 = vpack.c.b16 %v540, %v536
    %v633 = vpack.c.b16 %v541, %v537
    %v634 = vpack.c.b16 %v542, %v538
    %v635 = vpack.c.b16 %v543, %v539
    %v636 = vpack.c.b16 %v548, %v544
    %v637 = vpack.c.b16 %v549, %v545
    %v638 = vpack.c.b16 %v550, %v546
    %v639 = vpack.c.b16 %v551, %v547
    %v640 = vpack.c.b16 %v556, %v552
    %v641 = vpack.c.b16 %v557, %v553
    %v642 = vpack.c.b16 %v558, %v554
    %v643 = vpack.c.b16 %v559, %v555
    %v644 = vpack.c.b16 %v564, %v560
    %v645 = vpack.c.b16 %v565, %v561
    %v646 = vpack.c.b16 %v566, %v562
    %v647 = vpack.c.b16 %v567, %v563
    %v648 = vpack.c.b16 %v572, %v568
    %v649 = vpack.c.b16 %v573, %v569
    %v650 = vpack.c.b16 %v574, %v570
    %v651 = vpack.c.b16 %v575, %v571
    %v652 = vpack.c.b16 %v580, %v576
    %v653 = vpack.c.b16 %v581, %v577
    %v654 = vpack.c.b16 %v582, %v578
    %v655 = vpack.c.b16 %v583, %v579
    %v656 = vpack.c.b16 %v588, %v584
    %v657 = vpack.c.b16 %v589, %v585
    %v658 = vpack.c.b16 %v590, %v586
    %v659 = vpack.c.b16 %v591, %v587
    %v660 = vpack.c.b16 %v596, %v592
    %v661 = vpack.c.b16 %v597, %v593
    %v662 = vpack.c.b16 %v598, %v594
    %v663 = vpack.c.b16 %v599, %v595
    %728 = vmatprep.subr.bf16.mxu0 %v601
    %729 = vmatpush1.bf16.msra.mxu0 %v600
    %730 = vmatprep.subr.bf16.mxu0 %v605
    %731 = vmatpush1.bf16.msra.mxu0 %v604
    %732 = vmatprep.subr.bf16.mxu0 %v609
    %733 = vmatpush1.bf16.msra.mxu0 %v608
    %734 = vmatprep.subr.bf16.mxu0 %v613
    %735 = vmatpush1.bf16.msra.mxu0 %v612
    %736 = vmatprep.subr.bf16.mxu0 %v617
    %737 = vmatpush1.bf16.msra.mxu0 %v616
    %738 = vmatprep.subr.bf16.mxu0 %v621
    %739 = vmatpush1.bf16.msra.mxu0 %v620
    %740 = vmatprep.subr.bf16.mxu0 %v625
    %741 = vmatpush1.bf16.msra.mxu0 %v624
    %742 = vmatprep.subr.bf16.mxu0 %v629
    %743 = vmatpush1.bf16.msra.mxu0 %v628
    %744 = vmatprep.subr.bf16.mxu0 %v633
    %745 = vmatpush1.bf16.msra.mxu0 %v632
    %746 = vmatprep.subr.bf16.mxu0 %v637
    %747 = vmatpush1.bf16.msra.mxu0 %v636
    %748 = vmatprep.subr.bf16.mxu0 %v641
    %749 = vmatpush1.bf16.msra.mxu0 %v640
    %750 = vmatprep.subr.bf16.mxu0 %v645
    %751 = vmatpush1.bf16.msra.mxu0 %v644
    %752 = vmatprep.subr.bf16.mxu0 %v649
    %753 = vmatpush1.bf16.msra.mxu0 %v648
    %754 = vmatprep.subr.bf16.mxu0 %v653
    %755 = vmatpush1.bf16.msra.mxu0 %v652
    %756 = vmatprep.subr.bf16.mxu0 %v657
    %757 = vmatpush1.bf16.msra.mxu0 %v656
    %758 = vmatprep.subr.bf16.mxu0 %v661
    %759 = vmatpush1.bf16.msra.mxu0 %v660
    %760 = vmatprep.mubr.bf16.mxu0 %v321
    %761 = vmatmul.mubr.bf16.gmra.mrb[0].mxu0 %v320
    %v762 = vpop.f32.mrb[0].mxu0
    %v763 = vadd.f32 %v391, %v762
    %v764 = vpop.f32.mrb[0].mxu0
    %v765 = vadd.f32 %v395, %v764
    %v766 = vpop.f32.mrb[0].mxu0
    %v767 = vadd.f32 %v391, %v766
    %v768 = vpop.f32.mrb[0].mxu0
    %v769 = vadd.f32 %v395, %v768
    %770 = vdwg.mxu0
    %771 = vmatprep.subr.bf16.mxu0 %v603
    %772 = vmatpush1.bf16.msra.mxu0 %v602
    %773 = vmatprep.subr.bf16.mxu0 %v607
    %774 = vmatpush1.bf16.msra.mxu0 %v606
    %775 = vmatprep.subr.bf16.mxu0 %v611
    %776 = vmatpush1.bf16.msra.mxu0 %v610
    %777 = vmatprep.subr.bf16.mxu0 %v615
    %778 = vmatpush1.bf16.msra.mxu0 %v614
    %779 = vmatprep.subr.bf16.mxu0 %v619
    %780 = vmatpush1.bf16.msra.mxu0 %v618
    %781 = vmatprep.subr.bf16.mxu0 %v623
    %782 = vmatpush1.bf16.msra.mxu0 %v622
    %783 = vmatprep.subr.bf16.mxu0 %v627
    %784 = vmatpush1.bf16.msra.mxu0 %v626
    %785 = vmatprep.subr.bf16.mxu0 %v631
    %786 = vmatpush1.bf16.msra.mxu0 %v630
    %787 = vmatprep.subr.bf16.mxu0 %v635
    %788 = vmatpush1.bf16.msra.mxu0 %v634
    %789 = vmatprep.subr.bf16.mxu0 %v639
    %790 = vmatpush1.bf16.msra.mxu0 %v638
    %791 = vmatprep.subr.bf16.mxu0 %v643
    %792 = vmatpush1.bf16.msra.mxu0 %v642
    %793 = vmatprep.subr.bf16.mxu0 %v647
    %794 = vmatpush1.bf16.msra.mxu0 %v646
    %795 = vmatprep.subr.bf16.mxu0 %v651
    %796 = vmatpush1.bf16.msra.mxu0 %v650
    %797 = vmatprep.subr.bf16.mxu0 %v655
    %798 = vmatpush1.bf16.msra.mxu0 %v654
    %799 = vmatprep.subr.bf16.mxu0 %v659
    %800 = vmatpush1.bf16.msra.mxu0 %v658
    %801 = vmatprep.subr.bf16.mxu0 %v663
    %802 = vmatpush1.bf16.msra.mxu0 %v662
    %803 = vmatprep.mubr.bf16.mxu0 %v321
    %804 = vmatmul.mubr.bf16.gmra.mrb[0].mxu0 %v320
    %v805 = vpop.f32.mrb[0].mxu0
    %v806 = vadd.f32 %v399, %v805
    %v807 = vpop.f32.mrb[0].mxu0
    %v808 = vadd.f32 %v403, %v807
    %v809 = vpop.f32.mrb[0].mxu0
    %v810 = vadd.f32 %v399, %v809
    %v811 = vpop.f32.mrb[0].mxu0
    %v812 = vadd.f32 %v403, %v811
    %813 = vdwg.mxu0
    %v814 = vmax.f32 %v763, 0.0
    %v815 = vmax.f32 %v765, 0.0
    %v816 = vmax.f32 %v806, 0.0
    %v817 = vmax.f32 %v808, 0.0
    %v818 = vmax.f32 %v767, 0.0
    %v819 = vmax.f32 %v769, 0.0
    %v820 = vmax.f32 %v810, 0.0
    %v821 = vmax.f32 %v812, 0.0
    %v822 = vpack.c.bf16 %v818, %v814
    %v823 = vpack.c.bf16 %v819, %v815
    %v824 = vpack.c.bf16 %v820, %v816
    %v825 = vpack.c.bf16 %v821, %v817
    %v826 = vld [vmem:[#allocation7] sm:$0xff]
    %v827 = vld [vmem:[#allocation7 + $0x8] sm:$0xff]
    %v828 = vld [vmem:[#allocation7 + $0x10] sm:$0xff]
    %v829 = vld [vmem:[#allocation7 + $0x18] sm:$0xff]
    %v830 = vld [vmem:[#allocation7 + $0x20] sm:$0xff]
    %v831 = vld [vmem:[#allocation7 + $0x28] sm:$0xff]
    %v832 = vld [vmem:[#allocation7 + $0x30] sm:$0xff]
    %v833 = vld [vmem:[#allocation7 + $0x38] sm:$0xff]
    %v834 = vld [vmem:[#allocation7 + $0x40] sm:$0xff]
    %v835 = vld [vmem:[#allocation7 + $0x48] sm:$0xff]
    %v836 = vld [vmem:[#allocation7 + $0x50] sm:$0xff]
    %v837 = vld [vmem:[#allocation7 + $0x58] sm:$0xff]
    %v838 = vld [vmem:[#allocation7 + $0x60] sm:$0xff]
    %v839 = vld [vmem:[#allocation7 + $0x68] sm:$0xff]
    %v840 = vld [vmem:[#allocation7 + $0x70] sm:$0xff]
    %v841 = vld [vmem:[#allocation7 + $0x78] sm:$0xff]
    %v842 = vld [vmem:[#allocation7 + $0x80] sm:$0xff]
    %v843 = vld [vmem:[#allocation7 + $0x88] sm:$0xff]
    %v844 = vld [vmem:[#allocation7 + $0x90] sm:$0xff]
    %v845 = vld [vmem:[#allocation7 + $0x98] sm:$0xff]
    %v846 = vld [vmem:[#allocation7 + $0xa0] sm:$0xff]
    %v847 = vld [vmem:[#allocation7 + $0xa8] sm:$0xff]
    %v848 = vld [vmem:[#allocation7 + $0xb0] sm:$0xff]
    %v849 = vld [vmem:[#allocation7 + $0xb8] sm:$0xff]
    %v850 = vld [vmem:[#allocation7 + $0xc0] sm:$0xff]
    %v851 = vld [vmem:[#allocation7 + $0xc8] sm:$0xff]
    %v852 = vld [vmem:[#allocation7 + $0xd0] sm:$0xff]
    %v853 = vld [vmem:[#allocation7 + $0xd8] sm:$0xff]
    %v854 = vld [vmem:[#allocation7 + $0xe0] sm:$0xff]
    %v855 = vld [vmem:[#allocation7 + $0xe8] sm:$0xff]
    %v856 = vld [vmem:[#allocation7 + $0xf0] sm:$0xff]
    %v857 = vld [vmem:[#allocation7 + $0xf8] sm:$0xff]
    %v858 = vld [vmem:[#allocation7 + $0x100] sm:$0xff]
    %v859 = vld [vmem:[#allocation7 + $0x108] sm:$0xff]
    %v860 = vld [vmem:[#allocation7 + $0x110] sm:$0xff]
    %v861 = vld [vmem:[#allocation7 + $0x118] sm:$0xff]
    %v862 = vld [vmem:[#allocation7 + $0x120] sm:$0xff]
    %v863 = vld [vmem:[#allocation7 + $0x128] sm:$0xff]
    %v864 = vld [vmem:[#allocation7 + $0x130] sm:$0xff]
    %v865 = vld [vmem:[#allocation7 + $0x138] sm:$0xff]
    %v866 = vld [vmem:[#allocation7 + $0x140] sm:$0xff]
    %v867 = vld [vmem:[#allocation7 + $0x148] sm:$0xff]
    %v868 = vld [vmem:[#allocation7 + $0x150] sm:$0xff]
    %v869 = vld [vmem:[#allocation7 + $0x158] sm:$0xff]
    %v870 = vld [vmem:[#allocation7 + $0x160] sm:$0xff]
    %v871 = vld [vmem:[#allocation7 + $0x168] sm:$0xff]
    %v872 = vld [vmem:[#allocation7 + $0x170] sm:$0xff]
    %v873 = vld [vmem:[#allocation7 + $0x178] sm:$0xff]
    %v874 = vld [vmem:[#allocation7 + $0x180] sm:$0xff]
    %v875 = vld [vmem:[#allocation7 + $0x188] sm:$0xff]
    %v876 = vld [vmem:[#allocation7 + $0x190] sm:$0xff]
    %v877 = vld [vmem:[#allocation7 + $0x198] sm:$0xff]
    %v878 = vld [vmem:[#allocation7 + $0x1a0] sm:$0xff]
    %v879 = vld [vmem:[#allocation7 + $0x1a8] sm:$0xff]
    %v880 = vld [vmem:[#allocation7 + $0x1b0] sm:$0xff]
    %v881 = vld [vmem:[#allocation7 + $0x1b8] sm:$0xff]
    %v882 = vld [vmem:[#allocation7 + $0x1c0] sm:$0xff]
    %v883 = vld [vmem:[#allocation7 + $0x1c8] sm:$0xff]
    %v884 = vld [vmem:[#allocation7 + $0x1d0] sm:$0xff]
    %v885 = vld [vmem:[#allocation7 + $0x1d8] sm:$0xff]
    %v886 = vld [vmem:[#allocation7 + $0x1e0] sm:$0xff]
    %v887 = vld [vmem:[#allocation7 + $0x1e8] sm:$0xff]
    %v888 = vld [vmem:[#allocation7 + $0x1f0] sm:$0xff]
    %v889 = vld [vmem:[#allocation7 + $0x1f8] sm:$0xff]
    %v890 = vld [vmem:[%s8] sm:$0x3]
    %v892 = vlaneseq
    %v893 = vshrl.u32 %v892, 7
    %v894 = vsub.s32 0, %v893
    %v895 = vrot.slane %v890, %v894
    %v896 = vlaneseq
    %v897 = vshrl.u32 %v896, 7
    %v898 = vsub.s32 1, %v897
    %v899 = vrot.slane %v890, %v898
    %v966 = vunpack.c.l.b16 %v826
    %v967 = vunpack.c.h.b16 %v826
    %v968 = vunpack.c.l.b16 %v827
    %v969 = vunpack.c.h.b16 %v827
    %v970 = vunpack.c.l.b16 %v828
    %v971 = vunpack.c.h.b16 %v828
    %v972 = vunpack.c.l.b16 %v829
    %v973 = vunpack.c.h.b16 %v829
    %v974 = vunpack.c.l.b16 %v830
    %v975 = vunpack.c.h.b16 %v830
    %v976 = vunpack.c.l.b16 %v831
    %v977 = vunpack.c.h.b16 %v831
    %v978 = vunpack.c.l.b16 %v832
    %v979 = vunpack.c.h.b16 %v832
    %v980 = vunpack.c.l.b16 %v833
    %v981 = vunpack.c.h.b16 %v833
    %v982 = vunpack.c.l.b16 %v834
    %v983 = vunpack.c.h.b16 %v834
    %v984 = vunpack.c.l.b16 %v835
    %v985 = vunpack.c.h.b16 %v835
    %v986 = vunpack.c.l.b16 %v836
    %v987 = vunpack.c.h.b16 %v836
    %v988 = vunpack.c.l.b16 %v837
    %v989 = vunpack.c.h.b16 %v837
    %v990 = vunpack.c.l.b16 %v838
    %v991 = vunpack.c.h.b16 %v838
    %v992 = vunpack.c.l.b16 %v839
    %v993 = vunpack.c.h.b16 %v839
    %v994 = vunpack.c.l.b16 %v840
    %v995 = vunpack.c.h.b16 %v840
    %v996 = vunpack.c.l.b16 %v841
    %v997 = vunpack.c.h.b16 %v841
    %v998 = vunpack.c.l.b16 %v842
    %v999 = vunpack.c.h.b16 %v842
    %v1000 = vunpack.c.l.b16 %v843
    %v1001 = vunpack.c.h.b16 %v843
    %v1002 = vunpack.c.l.b16 %v844
    %v1003 = vunpack.c.h.b16 %v844
    %v1004 = vunpack.c.l.b16 %v845
    %v1005 = vunpack.c.h.b16 %v845
    %v1006 = vunpack.c.l.b16 %v846
    %v1007 = vunpack.c.h.b16 %v846
    %v1008 = vunpack.c.l.b16 %v847
    %v1009 = vunpack.c.h.b16 %v847
    %v1010 = vunpack.c.l.b16 %v848
    %v1011 = vunpack.c.h.b16 %v848
    %v1012 = vunpack.c.l.b16 %v849
    %v1013 = vunpack.c.h.b16 %v849
    %v1014 = vunpack.c.l.b16 %v850
    %v1015 = vunpack.c.h.b16 %v850
    %v1016 = vunpack.c.l.b16 %v851
    %v1017 = vunpack.c.h.b16 %v851
    %v1018 = vunpack.c.l.b16 %v852
    %v1019 = vunpack.c.h.b16 %v852
    %v1020 = vunpack.c.l.b16 %v853
    %v1021 = vunpack.c.h.b16 %v853
    %v1022 = vunpack.c.l.b16 %v854
    %v1023 = vunpack.c.h.b16 %v854
    %v1024 = vunpack.c.l.b16 %v855
    %v1025 = vunpack.c.h.b16 %v855
    %v1026 = vunpack.c.l.b16 %v856
    %v1027 = vunpack.c.h.b16 %v856
    %v1028 = vunpack.c.l.b16 %v857
    %v1029 = vunpack.c.h.b16 %v857
    %v1030 = vunpack.c.l.b16 %v858
    %v1031 = vunpack.c.h.b16 %v858
    %v1032 = vunpack.c.l.b16 %v859
    %v1033 = vunpack.c.h.b16 %v859
    %v1034 = vunpack.c.l.b16 %v860
    %v1035 = vunpack.c.h.b16 %v860
    %v1036 = vunpack.c.l.b16 %v861
    %v1037 = vunpack.c.h.b16 %v861
    %v1038 = vunpack.c.l.b16 %v862
    %v1039 = vunpack.c.h.b16 %v862
    %v1040 = vunpack.c.l.b16 %v863
    %v1041 = vunpack.c.h.b16 %v863
    %v1042 = vunpack.c.l.b16 %v864
    %v1043 = vunpack.c.h.b16 %v864
    %v1044 = vunpack.c.l.b16 %v865
    %v1045 = vunpack.c.h.b16 %v865
    %v1046 = vunpack.c.l.b16 %v866
    %v1047 = vunpack.c.h.b16 %v866
    %v1048 = vunpack.c.l.b16 %v867
    %v1049 = vunpack.c.h.b16 %v867
    %v1050 = vunpack.c.l.b16 %v868
    %v1051 = vunpack.c.h.b16 %v868
    %v1052 = vunpack.c.l.b16 %v869
    %v1053 = vunpack.c.h.b16 %v869
    %v1054 = vunpack.c.l.b16 %v870
    %v1055 = vunpack.c.h.b16 %v870
    %v1056 = vunpack.c.l.b16 %v871
    %v1057 = vunpack.c.h.b16 %v871
    %v1058 = vunpack.c.l.b16 %v872
    %v1059 = vunpack.c.h.b16 %v872
    %v1060 = vunpack.c.l.b16 %v873
    %v1061 = vunpack.c.h.b16 %v873
    %v1062 = vunpack.c.l.b16 %v874
    %v1063 = vunpack.c.h.b16 %v874
    %v1064 = vunpack.c.l.b16 %v875
    %v1065 = vunpack.c.h.b16 %v875
    %v1066 = vunpack.c.l.b16 %v876
    %v1067 = vunpack.c.h.b16 %v876
    %v1068 = vunpack.c.l.b16 %v877
    %v1069 = vunpack.c.h.b16 %v877
    %v1070 = vunpack.c.l.b16 %v878
    %v1071 = vunpack.c.h.b16 %v878
    %v1072 = vunpack.c.l.b16 %v879
    %v1073 = vunpack.c.h.b16 %v879
    %v1074 = vunpack.c.l.b16 %v880
    %v1075 = vunpack.c.h.b16 %v880
    %v1076 = vunpack.c.l.b16 %v881
    %v1077 = vunpack.c.h.b16 %v881
    %v1078 = vunpack.c.l.b16 %v882
    %v1079 = vunpack.c.h.b16 %v882
    %v1080 = vunpack.c.l.b16 %v883
    %v1081 = vunpack.c.h.b16 %v883
    %v1082 = vunpack.c.l.b16 %v884
    %v1083 = vunpack.c.h.b16 %v884
    %v1084 = vunpack.c.l.b16 %v885
    %v1085 = vunpack.c.h.b16 %v885
    %v1086 = vunpack.c.l.b16 %v886
    %v1087 = vunpack.c.h.b16 %v886
    %v1088 = vunpack.c.l.b16 %v887
    %v1089 = vunpack.c.h.b16 %v887
    %v1090 = vunpack.c.l.b16 %v888
    %v1091 = vunpack.c.h.b16 %v888
    %v1092 = vunpack.c.l.b16 %v889
    %v1093 = vunpack.c.h.b16 %v889
    %v1094 = vpack.c.b16 %v968, %v966
    %v1095 = vpack.c.b16 %v969, %v967
    %v1096 = vpack.c.b16 %v972, %v970
    %v1097 = vpack.c.b16 %v973, %v971
    %v1098 = vpack.c.b16 %v976, %v974
    %v1099 = vpack.c.b16 %v977, %v975
    %v1100 = vpack.c.b16 %v980, %v978
    %v1101 = vpack.c.b16 %v981, %v979
    %v1102 = vpack.c.b16 %v984, %v982
    %v1103 = vpack.c.b16 %v985, %v983
    %v1104 = vpack.c.b16 %v988, %v986
    %v1105 = vpack.c.b16 %v989, %v987
    %v1106 = vpack.c.b16 %v992, %v990
    %v1107 = vpack.c.b16 %v993, %v991
    %v1108 = vpack.c.b16 %v996, %v994
    %v1109 = vpack.c.b16 %v997, %v995
    %v1110 = vpack.c.b16 %v1000, %v998
    %v1111 = vpack.c.b16 %v1001, %v999
    %v1112 = vpack.c.b16 %v1004, %v1002
    %v1113 = vpack.c.b16 %v1005, %v1003
    %v1114 = vpack.c.b16 %v1008, %v1006
    %v1115 = vpack.c.b16 %v1009, %v1007
    %v1116 = vpack.c.b16 %v1012, %v1010
    %v1117 = vpack.c.b16 %v1013, %v1011
    %v1118 = vpack.c.b16 %v1016, %v1014
    %v1119 = vpack.c.b16 %v1017, %v1015
    %v1120 = vpack.c.b16 %v1020, %v1018
    %v1121 = vpack.c.b16 %v1021, %v1019
    %v1122 = vpack.c.b16 %v1024, %v1022
    %v1123 = vpack.c.b16 %v1025, %v1023
    %v1124 = vpack.c.b16 %v1028, %v1026
    %v1125 = vpack.c.b16 %v1029, %v1027
    %v1126 = vpack.c.b16 %v1032, %v1030
    %v1127 = vpack.c.b16 %v1033, %v1031
    %v1128 = vpack.c.b16 %v1036, %v1034
    %v1129 = vpack.c.b16 %v1037, %v1035
    %v1130 = vpack.c.b16 %v1040, %v1038
    %v1131 = vpack.c.b16 %v1041, %v1039
    %v1132 = vpack.c.b16 %v1044, %v1042
    %v1133 = vpack.c.b16 %v1045, %v1043
    %v1134 = vpack.c.b16 %v1048, %v1046
    %v1135 = vpack.c.b16 %v1049, %v1047
    %v1136 = vpack.c.b16 %v1052, %v1050
    %v1137 = vpack.c.b16 %v1053, %v1051
    %v1138 = vpack.c.b16 %v1056, %v1054
    %v1139 = vpack.c.b16 %v1057, %v1055
    %v1140 = vpack.c.b16 %v1060, %v1058
    %v1141 = vpack.c.b16 %v1061, %v1059
    %v1142 = vpack.c.b16 %v1064, %v1062
    %v1143 = vpack.c.b16 %v1065, %v1063
    %v1144 = vpack.c.b16 %v1068, %v1066
    %v1145 = vpack.c.b16 %v1069, %v1067
    %v1146 = vpack.c.b16 %v1072, %v1070
    %v1147 = vpack.c.b16 %v1073, %v1071
    %v1148 = vpack.c.b16 %v1076, %v1074
    %v1149 = vpack.c.b16 %v1077, %v1075
    %v1150 = vpack.c.b16 %v1080, %v1078
    %v1151 = vpack.c.b16 %v1081, %v1079
    %v1152 = vpack.c.b16 %v1084, %v1082
    %v1153 = vpack.c.b16 %v1085, %v1083
    %v1154 = vpack.c.b16 %v1088, %v1086
    %v1155 = vpack.c.b16 %v1089, %v1087
    %v1156 = vpack.c.b16 %v1092, %v1090
    %v1157 = vpack.c.b16 %v1093, %v1091
    %1222 = vmatprep.subr.bf16.mxu0 %v1095
    %1223 = vmatpush1.bf16.msra.mxu0 %v1094
    %1224 = vmatprep.subr.bf16.mxu0 %v1097
    %1225 = vmatpush1.bf16.msra.mxu0 %v1096
    %1226 = vmatprep.subr.bf16.mxu0 %v1099
    %1227 = vmatpush1.bf16.msra.mxu0 %v1098
    %1228 = vmatprep.subr.bf16.mxu0 %v1101
    %1229 = vmatpush1.bf16.msra.mxu0 %v1100
    %1230 = vmatprep.subr.bf16.mxu0 %v1103
    %1231 = vmatpush1.bf16.msra.mxu0 %v1102
    %1232 = vmatprep.subr.bf16.mxu0 %v1105
    %1233 = vmatpush1.bf16.msra.mxu0 %v1104
    %1234 = vmatprep.subr.bf16.mxu0 %v1107
    %1235 = vmatpush1.bf16.msra.mxu0 %v1106
    %1236 = vmatprep.subr.bf16.mxu0 %v1109
    %1237 = vmatpush1.bf16.msra.mxu0 %v1108
    %1238 = vmatprep.subr.bf16.mxu0 %v1111
    %1239 = vmatpush1.bf16.msra.mxu0 %v1110
    %1240 = vmatprep.subr.bf16.mxu0 %v1113
    %1241 = vmatpush1.bf16.msra.mxu0 %v1112
    %1242 = vmatprep.subr.bf16.mxu0 %v1115
    %1243 = vmatpush1.bf16.msra.mxu0 %v1114
    %1244 = vmatprep.subr.bf16.mxu0 %v1117
    %1245 = vmatpush1.bf16.msra.mxu0 %v1116
    %1246 = vmatprep.subr.bf16.mxu0 %v1119
    %1247 = vmatpush1.bf16.msra.mxu0 %v1118
    %1248 = vmatprep.subr.bf16.mxu0 %v1121
    %1249 = vmatpush1.bf16.msra.mxu0 %v1120
    %1250 = vmatprep.subr.bf16.mxu0 %v1123
    %1251 = vmatpush1.bf16.msra.mxu0 %v1122
    %1252 = vmatprep.subr.bf16.mxu0 %v1125
    %1253 = vmatpush1.bf16.msra.mxu0 %v1124
    %1254 = vmatprep.mubr.bf16.mxu0 %v823
    %1255 = vmatmul.mubr.bf16.gmra.mrb[0].mxu0 %v822
    %v1256 = vpop.f32.mrb[0].mxu0
    %v1257 = vadd.f32 %v895, %v1256
    %v1258 = vpop.f32.mrb[0].mxu0
    %v1259 = vadd.f32 %v899, %v1258
    %v1260 = vpop.f32.mrb[0].mxu0
    %v1261 = vadd.f32 %v895, %v1260
    %v1262 = vpop.f32.mrb[0].mxu0
    %v1263 = vadd.f32 %v899, %v1262
    %1264 = vdwg.mxu0
    %1265 = vmatprep.subr.bf16.mxu0 %v1127
    %1266 = vmatpush1.bf16.msra.mxu0 %v1126
    %1267 = vmatprep.subr.bf16.mxu0 %v1129
    %1268 = vmatpush1.bf16.msra.mxu0 %v1128
    %1269 = vmatprep.subr.bf16.mxu0 %v1131
    %1270 = vmatpush1.bf16.msra.mxu0 %v1130
    %1271 = vmatprep.subr.bf16.mxu0 %v1133
    %1272 = vmatpush1.bf16.msra.mxu0 %v1132
    %1273 = vmatprep.subr.bf16.mxu0 %v1135
    %1274 = vmatpush1.bf16.msra.mxu0 %v1134
    %1275 = vmatprep.subr.bf16.mxu0 %v1137
    %1276 = vmatpush1.bf16.msra.mxu0 %v1136
    %1277 = vmatprep.subr.bf16.mxu0 %v1139
    %1278 = vmatpush1.bf16.msra.mxu0 %v1138
    %1279 = vmatprep.subr.bf16.mxu0 %v1141
    %1280 = vmatpush1.bf16.msra.mxu0 %v1140
    %1281 = vmatprep.subr.bf16.mxu0 %v1143
    %1282 = vmatpush1.bf16.msra.mxu0 %v1142
    %1283 = vmatprep.subr.bf16.mxu0 %v1145
    %1284 = vmatpush1.bf16.msra.mxu0 %v1144
    %1285 = vmatprep.subr.bf16.mxu0 %v1147
    %1286 = vmatpush1.bf16.msra.mxu0 %v1146
    %1287 = vmatprep.subr.bf16.mxu0 %v1149
    %1288 = vmatpush1.bf16.msra.mxu0 %v1148
    %1289 = vmatprep.subr.bf16.mxu0 %v1151
    %1290 = vmatpush1.bf16.msra.mxu0 %v1150
    %1291 = vmatprep.subr.bf16.mxu0 %v1153
    %1292 = vmatpush1.bf16.msra.mxu0 %v1152
    %1293 = vmatprep.subr.bf16.mxu0 %v1155
    %1294 = vmatpush1.bf16.msra.mxu0 %v1154
    %1295 = vmatprep.subr.bf16.mxu0 %v1157
    %1296 = vmatpush1.bf16.msra.mxu0 %v1156
    %1297 = vmatprep.mubr.bf16.mxu0 %v825
    %1298 = vmatmul.mubr.bf16.gmra.mrb[0].mxu0 %v824
    %v1299 = vpop.f32.mrb[0].mxu0
    %v1300 = vadd.f32 %v1257, %v1299
    %v1301 = vpop.f32.mrb[0].mxu0
    %v1302 = vadd.f32 %v1259, %v1301
    %v1303 = vpop.f32.mrb[0].mxu0
    %v1304 = vadd.f32 %v1261, %v1303
    %v1305 = vpop.f32.mrb[0].mxu0
    %v1306 = vadd.f32 %v1263, %v1305
    %1307 = vdwg.mxu0
    %v1308 = vmax.f32 %v1300, 0.0
    %v1309 = vmax.f32 %v1302, 0.0
    %v1310 = vmax.f32 %v1304, 0.0
    %v1311 = vmax.f32 %v1306, 0.0
    %v1312 = vpack.c.bf16 %v1310, %v1308
    %v1313 = vpack.c.bf16 %v1311, %v1309
    %v1314 = vld [vmem:[#allocation8] sm:$0xf]
    %v1315 = vld [vmem:[#allocation8 + $0x4] sm:$0xf]
    %v1316 = vld [vmem:[#allocation8 + $0x8] sm:$0xf]
    %v1317 = vld [vmem:[#allocation8 + $0xc] sm:$0xf]
    %v1318 = vld [vmem:[#allocation8 + $0x10] sm:$0xf]
    %v1319 = vld [vmem:[#allocation8 + $0x14] sm:$0xf]
    %v1320 = vld [vmem:[#allocation8 + $0x18] sm:$0xf]
    %v1321 = vld [vmem:[#allocation8 + $0x1c] sm:$0xf]
    %v1322 = vld [vmem:[#allocation8 + $0x20] sm:$0xf]
    %v1323 = vld [vmem:[#allocation8 + $0x24] sm:$0xf]
    %v1324 = vld [vmem:[#allocation8 + $0x28] sm:$0xf]
    %v1325 = vld [vmem:[#allocation8 + $0x2c] sm:$0xf]
    %v1326 = vld [vmem:[#allocation8 + $0x30] sm:$0xf]
    %v1327 = vld [vmem:[#allocation8 + $0x34] sm:$0xf]
    %v1328 = vld [vmem:[#allocation8 + $0x38] sm:$0xf]
    %v1329 = vld [vmem:[#allocation8 + $0x3c] sm:$0xf]
    %v1330 = vld [vmem:[#allocation8 + $0x40] sm:$0xf]
    %v1331 = vld [vmem:[#allocation8 + $0x44] sm:$0xf]
    %v1332 = vld [vmem:[#allocation8 + $0x48] sm:$0xf]
    %v1333 = vld [vmem:[#allocation8 + $0x4c] sm:$0xf]
    %v1334 = vld [vmem:[#allocation8 + $0x50] sm:$0xf]
    %v1335 = vld [vmem:[#allocation8 + $0x54] sm:$0xf]
    %v1336 = vld [vmem:[#allocation8 + $0x58] sm:$0xf]
    %v1337 = vld [vmem:[#allocation8 + $0x5c] sm:$0xf]
    %v1338 = vld [vmem:[#allocation8 + $0x60] sm:$0xf]
    %v1339 = vld [vmem:[#allocation8 + $0x64] sm:$0xf]
    %v1340 = vld [vmem:[#allocation8 + $0x68] sm:$0xf]
    %v1341 = vld [vmem:[#allocation8 + $0x6c] sm:$0xf]
    %v1342 = vld [vmem:[#allocation8 + $0x70] sm:$0xf]
    %v1343 = vld [vmem:[#allocation8 + $0x74] sm:$0xf]
    %v1344 = vld [vmem:[#allocation8 + $0x78] sm:$0xf]
    %v1345 = vld [vmem:[#allocation8 + $0x7c] sm:$0xf]
    %v1346 = vld [vmem:[%s10] sm:$0x1]
    %v1348 = vlaneseq
    %v1349 = vshrl.u32 %v1348, 7
    %v1350 = vsub.s32 0, %v1349
    %v1351 = vrot.slane %v1346, %v1350
    %v1385 = vunpack.c.l.b16 %v1314
    %v1386 = vunpack.c.l.b16 %v1315
    %v1387 = vunpack.c.l.b16 %v1316
    %v1388 = vunpack.c.l.b16 %v1317
    %v1389 = vunpack.c.l.b16 %v1318
    %v1390 = vunpack.c.l.b16 %v1319
    %v1391 = vunpack.c.l.b16 %v1320
    %v1392 = vunpack.c.l.b16 %v1321
    %v1393 = vunpack.c.l.b16 %v1322
    %v1394 = vunpack.c.l.b16 %v1323
    %v1395 = vunpack.c.l.b16 %v1324
    %v1396 = vunpack.c.l.b16 %v1325
    %v1397 = vunpack.c.l.b16 %v1326
    %v1398 = vunpack.c.l.b16 %v1327
    %v1399 = vunpack.c.l.b16 %v1328
    %v1400 = vunpack.c.l.b16 %v1329
    %v1401 = vunpack.c.l.b16 %v1330
    %v1402 = vunpack.c.l.b16 %v1331
    %v1403 = vunpack.c.l.b16 %v1332
    %v1404 = vunpack.c.l.b16 %v1333
    %v1405 = vunpack.c.l.b16 %v1334
    %v1406 = vunpack.c.l.b16 %v1335
    %v1407 = vunpack.c.l.b16 %v1336
    %v1408 = vunpack.c.l.b16 %v1337
    %v1409 = vunpack.c.l.b16 %v1338
    %v1410 = vunpack.c.l.b16 %v1339
    %v1411 = vunpack.c.l.b16 %v1340
    %v1412 = vunpack.c.l.b16 %v1341
    %v1413 = vunpack.c.l.b16 %v1342
    %v1414 = vunpack.c.l.b16 %v1343
    %v1415 = vunpack.c.l.b16 %v1344
    %v1416 = vunpack.c.l.b16 %v1345
    %v1417 = vpack.c.b16 %v1386, %v1385
    %v1418 = vpack.c.b16 %v1388, %v1387
    %v1419 = vpack.c.b16 %v1390, %v1389
    %v1420 = vpack.c.b16 %v1392, %v1391
    %v1421 = vpack.c.b16 %v1394, %v1393
    %v1422 = vpack.c.b16 %v1396, %v1395
    %v1423 = vpack.c.b16 %v1398, %v1397
    %v1424 = vpack.c.b16 %v1400, %v1399
    %v1425 = vpack.c.b16 %v1402, %v1401
    %v1426 = vpack.c.b16 %v1404, %v1403
    %v1427 = vpack.c.b16 %v1406, %v1405
    %v1428 = vpack.c.b16 %v1408, %v1407
    %v1429 = vpack.c.b16 %v1410, %v1409
    %v1430 = vpack.c.b16 %v1412, %v1411
    %v1431 = vpack.c.b16 %v1414, %v1413
    %v1432 = vpack.c.b16 %v1416, %v1415
    %1449 = vmatprep.subr.bf16.mxu0 0
    %1450 = vmatpush1.bf16.msra.mxu0 %v1417
    %1451 = vmatprep.subr.bf16.mxu0 0
    %1452 = vmatpush1.bf16.msra.mxu0 %v1418
    %1453 = vmatprep.subr.bf16.mxu0 0
    %1454 = vmatpush1.bf16.msra.mxu0 %v1419
    %1455 = vmatprep.subr.bf16.mxu0 0
    %1456 = vmatpush1.bf16.msra.mxu0 %v1420
    %1457 = vmatprep.subr.bf16.mxu0 0
    %1458 = vmatpush1.bf16.msra.mxu0 %v1421
    %1459 = vmatprep.subr.bf16.mxu0 0
    %1460 = vmatpush1.bf16.msra.mxu0 %v1422
    %1461 = vmatprep.subr.bf16.mxu0 0
    %1462 = vmatpush1.bf16.msra.mxu0 %v1423
    %1463 = vmatprep.subr.bf16.mxu0 0
    %1464 = vmatpush1.bf16.msra.mxu0 %v1424
    %1465 = vmatprep.subr.bf16.mxu0 0
    %1466 = vmatpush1.bf16.msra.mxu0 %v1425
    %1467 = vmatprep.subr.bf16.mxu0 0
    %1468 = vmatpush1.bf16.msra.mxu0 %v1426
    %1469 = vmatprep.subr.bf16.mxu0 0
    %1470 = vmatpush1.bf16.msra.mxu0 %v1427
    %1471 = vmatprep.subr.bf16.mxu0 0
    %1472 = vmatpush1.bf16.msra.mxu0 %v1428
    %1473 = vmatprep.subr.bf16.mxu0 0
    %1474 = vmatpush1.bf16.msra.mxu0 %v1429
    %1475 = vmatprep.subr.bf16.mxu0 0
    %1476 = vmatpush1.bf16.msra.mxu0 %v1430
    %1477 = vmatprep.subr.bf16.mxu0 0
    %1478 = vmatpush1.bf16.msra.mxu0 %v1431
    %1479 = vmatprep.subr.bf16.mxu0 0
    %1480 = vmatpush1.bf16.msra.mxu0 %v1432
    %1481 = vmatprep.mubr.bf16.mxu0 %v1313
    %1482 = vmatmul.mubr.bf16.gmra.mrb[0].mxu0 %v1312
    %v1483 = vpop.f32.mrb[0].mxu0
    %v1484 = vadd.f32 %v1351, %v1483
    %v1485 = vpop.f32.mrb[0].mxu0
    %v1486 = vpop.f32.mrb[0].mxu0
    %v1487 = vadd.f32 %v1351, %v1486
    %v1488 = vpop.f32.mrb[0].mxu0
    %1489 = vdwg.mxu0
    %v1490 = vmax.f32 %v1484, 0.0
    %v1491 = vmax.f32 %v1487, 0.0
    %v1492 = vpack.c.bf16 %v1491, %v1490
    %v1493 = vunpack.c.l.bf16 %v1492
    %v1494 = vunpack.c.h.bf16 %v1492
    %v1495 = vld [vmem:[%s11] sm:$0x1]
    %v1497 = vlaneseq
    %v1498 = vshrl.u32 %v1497, 7
    %v1499 = vsub.s32 0, %v1498
    %v1500 = vrot.slane %v1495, %v1499
    %v1502 = vmul.f32 %v1493, %v1500
    %v1503 = vmul.f32 %v1494, %v1500
    %1504 = vadd.xlane.f32.xlu0 %v1502
    %v1505 = vpop.xlane.xlu0 %1504
    %1506 = vadd.xlane.f32.xlu0 %v1503
    %v1507 = vpop.xlane.xlu0 %1506
    %v1508 = vld [vmem:[#allocation2] sm:$0x1]
    %v1510 = vlaneseq
    %v1511 = vshrl.u32 %v1510, 7
    %v1512 = vsub.s32 0, %v1511
    %v1513 = vrot.slane %v1508, %v1512
    %v1515 = vadd.f32 %v1505, %v1513
    %v1516 = vadd.f32 %v1507, %v1513
    %vm1517 = vcmask 7168
    %1518 = vst.msk [vmem:[%s13] sm:$0xff] %vm1517, %v1515
    %1519 = vst.msk [vmem:[%s13 + $0x8] sm:$0xff] %vm1517, %v1516
    // Predicated region
    $region70: #{tpu_custom_call.1} parent=1 // pred_check
      _
    $region71: #{tpu_custom_call.1} parent=1 // pred_check_branch
      %1521 = sbr.rel (0) target = $region73
    $region72: #{tpu_custom_call.1} parent=1 // pred_region
      _
    $region73: #{tpu_custom_call.1} parent=1 // pred_fallthru
      _
    // Predicated region
    $region74: #{tpu_custom_call.1} parent=1 // pred_check
      _
    $region75: #{tpu_custom_call.1} parent=1 // pred_check_branch
      %1523 = sbr.rel (0) target = $region77
    $region76: #{tpu_custom_call.1} parent=1 // pred_region
      _
    $region77: #{tpu_custom_call.1} parent=1 // pred_fallthru
      _
    %1524 = vsyncpa [#allocation4], 1
    %1525 = vsyncpa [#allocation6], 1
    %1526 = vsyncpa [#allocation9], 1

</llo_original>
